<compile_context>
chip_gen: v6e
topology: v6e:2x2x1
jax: 0.10.0
libtpu: 0.0.40
codegen_flags: <defaults>
</compile_context>

<pallas_src>
import functools

import jax
import jax.numpy as jnp
from jax.experimental import pallas as pl
from jax.experimental.pallas import tpu as pltpu


def _attention_kernel(x_ref, wqkv_ref, wout_ref, bout_ref, o_ref, acc_ref,
                      *, bb, heads, dim_head):
    # x_ref:    (BB, N, dim)      f32 activations for BB batch elements
    # wqkv_ref: (dim, 3*inner)    bf16, Q columns pre-scaled by dim_head**-0.5
    # wout_ref: (inner, dim)      bf16 output projection
    # bout_ref: (1, dim)          f32 output projection bias
    # o_ref:    (BB, N, dim)
    # acc_ref:  (BB*N, inner)     f32 VMEM scratch for per-head outputs
    n = x_ref.shape[1]
    dim = x_ref.shape[2]
    inner = heads * dim_head

    # --- fused QKV projection over all BB*N rows (bf16 MXU, f32 accumulate) ---
    x2 = x_ref[...].reshape(bb * n, dim).astype(jnp.bfloat16)
    qkv = jnp.dot(x2, wqkv_ref[...],
                  preferred_element_type=jnp.float32)          # (BB*N, 3*inner) f32
    # (softmax scale already folded into the Q columns of wqkv by the wrapper)

    # --- per (batch, head) attention; static 2-D lane slices, no 3-D relayouts ---
    for b in range(bb):
        r0 = b * n
        for h in range(heads):
            c0 = h * dim_head
            q_h = qkv[r0:r0 + n, c0:c0 + dim_head]                       # (N, d)
            k_h = qkv[r0:r0 + n, inner + c0:inner + c0 + dim_head]       # (N, d)
            v_h = qkv[r0:r0 + n, 2 * inner + c0:2 * inner + c0 + dim_head]

            # scores: contract the head dim of q and k directly (q @ k^T)
            s = jax.lax.dot_general(
                q_h.astype(jnp.bfloat16), k_h.astype(jnp.bfloat16),
                (((1,), (1,)), ((), ())),
                preferred_element_type=jnp.float32)                      # (N, N) f32

            # numerically-stable softmax in f32; normalization deferred
            m = jnp.max(s, axis=-1, keepdims=True)
            e = jnp.exp(s - m)
            denom = jnp.sum(e, axis=-1, keepdims=True)

            o_h = jnp.dot(e.astype(jnp.bfloat16), v_h.astype(jnp.bfloat16),
                          preferred_element_type=jnp.float32)            # (N, d)
            o_h = o_h * pl.reciprocal(denom, approx=True)   # deferred normalize (EUP)

            acc_ref[r0:r0 + n, c0:c0 + dim_head] = o_h

    # --- output projection for the whole (BB*N, inner) slab (bf16 MXU) ---
    out_all = acc_ref[...].astype(jnp.bfloat16)
    y = jnp.dot(out_all, wout_ref[...], preferred_element_type=jnp.float32)
    y = y + bout_ref[...]
    o_ref[...] = y.reshape(bb, n, dim).astype(o_ref.dtype)


def attention_pallas(x, w_qkv, w_out, b_out, *, heads, dim_head):
    """x: (B, N, dim); w_qkv: (dim, 3*heads*dim_head) (pre-transposed, no bias);
    w_out: (heads*dim_head, dim); b_out: (dim,). Returns (B, N, dim)."""
    B, N, dim = x.shape
    inner = heads * dim_head
    scale = dim_head ** -0.5

    # batch elements per grid step: raise the MXU M dim of the projection matmuls
    bb = 1
    for cand in (8, 4, 2, 1):
        if B % cand == 0:
            bb = cand
            break

    # fold the softmax scale into the Q columns of the qkv weight; bf16 weights
    w_qkv_scaled = w_qkv.at[:, :inner].multiply(scale)
    w_qkv_bf16 = w_qkv_scaled.astype(jnp.bfloat16)
    w_out_bf16 = w_out.astype(jnp.bfloat16)
    b_out2 = b_out.reshape(1, dim).astype(jnp.float32)

    kernel = functools.partial(_attention_kernel,
                               bb=bb, heads=heads, dim_head=dim_head)

    return pl.pallas_call(
        kernel,
        out_shape=jax.ShapeDtypeStruct((B, N, dim), x.dtype),
        grid_spec=pltpu.PrefetchScalarGridSpec(
            num_scalar_prefetch=0,
            grid=(B // bb,),
            in_specs=[
                pl.BlockSpec((bb, N, dim), lambda i: (i, 0, 0)),
                pl.BlockSpec((dim, 3 * inner), lambda i: (0, 0)),
                pl.BlockSpec((inner, dim), lambda i: (0, 0)),
                pl.BlockSpec((1, dim), lambda i: (0, 0)),
            ],
            out_specs=pl.BlockSpec((bb, N, dim), lambda i: (i, 0, 0)),
            scratch_shapes=[pltpu.VMEM((bb * N, inner), jnp.float32)],
        ),
        compiler_params=pltpu.CompilerParams(
            dimension_semantics=("parallel",),
            vmem_limit_bytes=64 * 1024 * 1024),
    )(x, w_qkv_bf16, w_out_bf16, b_out2)


def attention_ref(x, w_qkv, w_out, b_out, *, heads, dim_head):
    """Pure-JAX f32 reference mirroring the PyTorch forward (dropout=0)."""
    B, N, dim = x.shape
    inner = heads * dim_head
    scale = dim_head ** -0.5
    qkv = x @ w_qkv                                        # (B, N, 3*inner)
    q, k, v = jnp.split(qkv, 3, axis=-1)

    def to_heads(t):
        return t.reshape(B, N, heads, dim_head).transpose(0, 2, 1, 3)

    q, k, v = map(to_heads, (q, k, v))                     # (B, h, N, d)
    dots = jnp.einsum('bhnd,bhmd->bhnm', q, k) * scale
    attn = jax.nn.softmax(dots, axis=-1)
    out = jnp.einsum('bhnm,bhmd->bhnd', attn, v)
    out = out.transpose(0, 2, 1, 3).reshape(B, N, inner)
    return out @ w_out + b_out


if __name__ == "__main__":
    # small shapes consistent with the module's forward
    B, N, dim = 2, 8, 32
    heads, dim_head = 4, 8
    inner = heads * dim_head

    key = jax.random.PRNGKey(0)
    kx, kqkv, kwo, kbo = jax.random.split(key, 4)

    x = jax.random.normal(kx, (B, N, dim), dtype=jnp.float32)
    # PyTorch Linear weight is (out, in); we store the transposed (in, out) form
    w_qkv = jax.random.normal(kqkv, (dim, 3 * inner), dtype=jnp.float32) * 0.05
    w_out = jax.random.normal(kwo, (inner, dim), dtype=jnp.float32) * 0.05
    b_out = jax.random.normal(kbo, (dim,), dtype=jnp.float32) * 0.05

    y = attention_pallas(x, w_qkv, w_out, b_out, heads=heads, dim_head=dim_head)
    y = jax.block_until_ready(y)

    y_ref = attention_ref(x, w_qkv, w_out, b_out, heads=heads, dim_head=dim_head)
    # bf16 MXU operands -> slightly looser tolerance than pure-f32
    assert jnp.allclose(y, y_ref, atol=2e-2, rtol=2e-2), "mismatch vs reference"

    print("KERNEL_OK")
</pallas_src>

<mosaic_0001>
module attributes {stable_mosaic.version = 11 : i64} {
  func.func @_attention_kernel(%arg0: i32, %arg1: memref<2x8x32xf32, #tpu.memory_space<vmem>>, %arg2: memref<32x96xbf16, #tpu.memory_space<vmem>>, %arg3: memref<32x32xbf16, #tpu.memory_space<vmem>>, %arg4: memref<1x32xf32, #tpu.memory_space<vmem>>, %arg5: memref<2x8x32xf32, #tpu.memory_space<vmem>>, %arg6: memref<16x32xf32, #tpu.memory_space<vmem>>) attributes {dimension_semantics = [#tpu.dimension_semantics<parallel>], iteration_bounds = array<i64: 1>, scalar_prefetch = 0 : i64, scratch_operands = 1 : i64, tpu.core_type = #tpu.core_type<tc>, window_params = [{transform_indices = @transform_0, window_bounds = array<i64: 2, 8, 32>}, {pipeline_mode = #tpu.pipeline_mode<synchronous>, transform_indices = @transform_1, window_bounds = array<i64: 32, 96>}, {pipeline_mode = #tpu.pipeline_mode<synchronous>, transform_indices = @transform_2, window_bounds = array<i64: 32, 32>}, {pipeline_mode = #tpu.pipeline_mode<synchronous>, transform_indices = @transform_3, window_bounds = array<i64: 1, 32>}, {transform_indices = @transform_4, window_bounds = array<i64: 2, 8, 32>}]} {
    %c0 = arith.constant 0 : index
    %c0_0 = arith.constant 0 : index
    %c0_1 = arith.constant 0 : index
    %0 = vector.load %arg1[%c0, %c0_0, %c0_1] : memref<2x8x32xf32, #tpu.memory_space<vmem>>, vector<2x8x32xf32>
    %1 = vector.shape_cast %0 : vector<2x8x32xf32> to vector<16x32xf32>
    %2 = arith.truncf %1 : vector<16x32xf32> to vector<16x32xbf16>
    %c0_2 = arith.constant 0 : index
    %c0_3 = arith.constant 0 : index
    %3 = vector.load %arg2[%c0_2, %c0_3] : memref<32x96xbf16, #tpu.memory_space<vmem>>, vector<32x96xbf16>
    %cst = arith.constant dense<0.000000e+00> : vector<16x96xf32>
    %4 = tpu.matmul %2, %3, %cst {dimension_numbers = #tpu.dot_dimension_numbers<[1], [0], [0], [1], [0, 0, 1, 1], [], []>} : vector<16x32xbf16>, vector<32x96xbf16>, vector<16x96xf32> -> vector<16x96xf32>
    %5 = vector.extract_strided_slice %4 {offsets = [0, 0], sizes = [8, 8], strides = [1, 1]} : vector<16x96xf32> to vector<8x8xf32>
    %6 = vector.extract_strided_slice %4 {offsets = [0, 32], sizes = [8, 8], strides = [1, 1]} : vector<16x96xf32> to vector<8x8xf32>
    %7 = vector.extract_strided_slice %4 {offsets = [0, 64], sizes = [8, 8], strides = [1, 1]} : vector<16x96xf32> to vector<8x8xf32>
    %8 = arith.truncf %5 : vector<8x8xf32> to vector<8x8xbf16>
    %9 = arith.truncf %6 : vector<8x8xf32> to vector<8x8xbf16>
    %cst_4 = arith.constant dense<0.000000e+00> : vector<8x8xf32>
    %10 = tpu.matmul %8, %9, %cst_4 {dimension_numbers = #tpu.dot_dimension_numbers<[1], [1], [0], [0], [0, 0, 1, 0], [], []>} : vector<8x8xbf16>, vector<8x8xbf16>, vector<8x8xf32> -> vector<8x8xf32>
    %cst_5 = arith.constant dense<0xFF800000> : vector<8xf32>
    %11 = vector.multi_reduction <maximumf>, %10, %cst_5 [1] : vector<8x8xf32> to vector<8xf32>
    %12 = vector.shape_cast %11 : vector<8xf32> to vector<8x1xf32>
    %13 = vector.broadcast %12 : vector<8x1xf32> to vector<8x8xf32>
    %14 = arith.subf %10, %13 : vector<8x8xf32>
    %15 = math.exp %14 : vector<8x8xf32>
    %cst_6 = arith.constant dense<0.000000e+00> : vector<8xf32>
    %16 = vector.multi_reduction <add>, %15, %cst_6 [1] : vector<8x8xf32> to vector<8xf32>
    %17 = vector.shape_cast %16 : vector<8xf32> to vector<8x1xf32>
    %18 = arith.truncf %15 : vector<8x8xf32> to vector<8x8xbf16>
    %19 = arith.truncf %7 : vector<8x8xf32> to vector<8x8xbf16>
    %cst_7 = arith.constant dense<0.000000e+00> : vector<8x8xf32>
    %20 = tpu.matmul %18, %19, %cst_7 {dimension_numbers = #tpu.dot_dimension_numbers<[1], [0], [0], [1], [0, 0, 1, 1], [], []>} : vector<8x8xbf16>, vector<8x8xbf16>, vector<8x8xf32> -> vector<8x8xf32>
    %21 = tpu.reciprocal %17 {approx = true} : vector<8x1xf32> -> vector<8x1xf32>
    %22 = vector.broadcast %21 : vector<8x1xf32> to vector<8x8xf32>
    %23 = arith.mulf %20, %22 : vector<8x8xf32>
    %c0_8 = arith.constant 0 : index
    %c0_9 = arith.constant 0 : index
    %24 = vector.load %arg6[%c0_8, %c0_9] : memref<16x32xf32, #tpu.memory_space<vmem>>, vector<8x8xf32>
    tpu.vector_store %arg6[%c0_8, %c0_9], %23 {strides = array<i32>} : memref<16x32xf32, #tpu.memory_space<vmem>>, vector<8x8xf32>,
    %25 = vector.extract_strided_slice %4 {offsets = [0, 8], sizes = [8, 8], strides = [1, 1]} : vector<16x96xf32> to vector<8x8xf32>
    %26 = vector.extract_strided_slice %4 {offsets = [0, 40], sizes = [8, 8], strides = [1, 1]} : vector<16x96xf32> to vector<8x8xf32>
    %27 = vector.extract_strided_slice %4 {offsets = [0, 72], sizes = [8, 8], strides = [1, 1]} : vector<16x96xf32> to vector<8x8xf32>
    %28 = arith.truncf %25 : vector<8x8xf32> to vector<8x8xbf16>
    %29 = arith.truncf %26 : vector<8x8xf32> to vector<8x8xbf16>
    %cst_10 = arith.constant dense<0.000000e+00> : vector<8x8xf32>
    %30 = tpu.matmul %28, %29, %cst_10 {dimension_numbers = #tpu.dot_dimension_numbers<[1], [1], [0], [0], [0, 0, 1, 0], [], []>} : vector<8x8xbf16>, vector<8x8xbf16>, vector<8x8xf32> -> vector<8x8xf32>
    %cst_11 = arith.constant dense<0xFF800000> : vector<8xf32>
    %31 = vector.multi_reduction <maximumf>, %30, %cst_11 [1] : vector<8x8xf32> to vector<8xf32>
    %32 = vector.shape_cast %31 : vector<8xf32> to vector<8x1xf32>
    %33 = vector.broadcast %32 : vector<8x1xf32> to vector<8x8xf32>
    %34 = arith.subf %30, %33 : vector<8x8xf32>
    %35 = math.exp %34 : vector<8x8xf32>
    %cst_12 = arith.constant dense<0.000000e+00> : vector<8xf32>
    %36 = vector.multi_reduction <add>, %35, %cst_12 [1] : vector<8x8xf32> to vector<8xf32>
    %37 = vector.shape_cast %36 : vector<8xf32> to vector<8x1xf32>
    %38 = arith.truncf %35 : vector<8x8xf32> to vector<8x8xbf16>
    %39 = arith.truncf %27 : vector<8x8xf32> to vector<8x8xbf16>
    %cst_13 = arith.constant dense<0.000000e+00> : vector<8x8xf32>
    %40 = tpu.matmul %38, %39, %cst_13 {dimension_numbers = #tpu.dot_dimension_numbers<[1], [0], [0], [1], [0, 0, 1, 1], [], []>} : vector<8x8xbf16>, vector<8x8xbf16>, vector<8x8xf32> -> vector<8x8xf32>
    %41 = tpu.reciprocal %37 {approx = true} : vector<8x1xf32> -> vector<8x1xf32>
    %42 = vector.broadcast %41 : vector<8x1xf32> to vector<8x8xf32>
    %43 = arith.mulf %40, %42 : vector<8x8xf32>
    %c0_14 = arith.constant 0 : index
    %c8 = arith.constant 8 : index
    %44 = vector.load %arg6[%c0_14, %c8] : memref<16x32xf32, #tpu.memory_space<vmem>>, vector<8x8xf32>
    tpu.vector_store %arg6[%c0_14, %c8], %43 {strides = array<i32>} : memref<16x32xf32, #tpu.memory_space<vmem>>, vector<8x8xf32>,
    %45 = vector.extract_strided_slice %4 {offsets = [0, 16], sizes = [8, 8], strides = [1, 1]} : vector<16x96xf32> to vector<8x8xf32>
    %46 = vector.extract_strided_slice %4 {offsets = [0, 48], sizes = [8, 8], strides = [1, 1]} : vector<16x96xf32> to vector<8x8xf32>
    %47 = vector.extract_strided_slice %4 {offsets = [0, 80], sizes = [8, 8], strides = [1, 1]} : vector<16x96xf32> to vector<8x8xf32>
    %48 = arith.truncf %45 : vector<8x8xf32> to vector<8x8xbf16>
    %49 = arith.truncf %46 : vector<8x8xf32> to vector<8x8xbf16>
    %cst_15 = arith.constant dense<0.000000e+00> : vector<8x8xf32>
    %50 = tpu.matmul %48, %49, %cst_15 {dimension_numbers = #tpu.dot_dimension_numbers<[1], [1], [0], [0], [0, 0, 1, 0], [], []>} : vector<8x8xbf16>, vector<8x8xbf16>, vector<8x8xf32> -> vector<8x8xf32>
    %cst_16 = arith.constant dense<0xFF800000> : vector<8xf32>
    %51 = vector.multi_reduction <maximumf>, %50, %cst_16 [1] : vector<8x8xf32> to vector<8xf32>
    %52 = vector.shape_cast %51 : vector<8xf32> to vector<8x1xf32>
    %53 = vector.broadcast %52 : vector<8x1xf32> to vector<8x8xf32>
    %54 = arith.subf %50, %53 : vector<8x8xf32>
    %55 = math.exp %54 : vector<8x8xf32>
    %cst_17 = arith.constant dense<0.000000e+00> : vector<8xf32>
    %56 = vector.multi_reduction <add>, %55, %cst_17 [1] : vector<8x8xf32> to vector<8xf32>
    %57 = vector.shape_cast %56 : vector<8xf32> to vector<8x1xf32>
    %58 = arith.truncf %55 : vector<8x8xf32> to vector<8x8xbf16>
    %59 = arith.truncf %47 : vector<8x8xf32> to vector<8x8xbf16>
    %cst_18 = arith.constant dense<0.000000e+00> : vector<8x8xf32>
    %60 = tpu.matmul %58, %59, %cst_18 {dimension_numbers = #tpu.dot_dimension_numbers<[1], [0], [0], [1], [0, 0, 1, 1], [], []>} : vector<8x8xbf16>, vector<8x8xbf16>, vector<8x8xf32> -> vector<8x8xf32>
    %61 = tpu.reciprocal %57 {approx = true} : vector<8x1xf32> -> vector<8x1xf32>
    %62 = vector.broadcast %61 : vector<8x1xf32> to vector<8x8xf32>
    %63 = arith.mulf %60, %62 : vector<8x8xf32>
    %c0_19 = arith.constant 0 : index
    %c16 = arith.constant 16 : index
    %64 = vector.load %arg6[%c0_19, %c16] : memref<16x32xf32, #tpu.memory_space<vmem>>, vector<8x8xf32>
    tpu.vector_store %arg6[%c0_19, %c16], %63 {strides = array<i32>} : memref<16x32xf32, #tpu.memory_space<vmem>>, vector<8x8xf32>,
    %65 = vector.extract_strided_slice %4 {offsets = [0, 24], sizes = [8, 8], strides = [1, 1]} : vector<16x96xf32> to vector<8x8xf32>
    %66 = vector.extract_strided_slice %4 {offsets = [0, 56], sizes = [8, 8], strides = [1, 1]} : vector<16x96xf32> to vector<8x8xf32>
    %67 = vector.extract_strided_slice %4 {offsets = [0, 88], sizes = [8, 8], strides = [1, 1]} : vector<16x96xf32> to vector<8x8xf32>
    %68 = arith.truncf %65 : vector<8x8xf32> to vector<8x8xbf16>
    %69 = arith.truncf %66 : vector<8x8xf32> to vector<8x8xbf16>
    %cst_20 = arith.constant dense<0.000000e+00> : vector<8x8xf32>
    %70 = tpu.matmul %68, %69, %cst_20 {dimension_numbers = #tpu.dot_dimension_numbers<[1], [1], [0], [0], [0, 0, 1, 0], [], []>} : vector<8x8xbf16>, vector<8x8xbf16>, vector<8x8xf32> -> vector<8x8xf32>
    %cst_21 = arith.constant dense<0xFF800000> : vector<8xf32>
    %71 = vector.multi_reduction <maximumf>, %70, %cst_21 [1] : vector<8x8xf32> to vector<8xf32>
    %72 = vector.shape_cast %71 : vector<8xf32> to vector<8x1xf32>
    %73 = vector.broadcast %72 : vector<8x1xf32> to vector<8x8xf32>
    %74 = arith.subf %70, %73 : vector<8x8xf32>
    %75 = math.exp %74 : vector<8x8xf32>
    %cst_22 = arith.constant dense<0.000000e+00> : vector<8xf32>
    %76 = vector.multi_reduction <add>, %75, %cst_22 [1] : vector<8x8xf32> to vector<8xf32>
    %77 = vector.shape_cast %76 : vector<8xf32> to vector<8x1xf32>
    %78 = arith.truncf %75 : vector<8x8xf32> to vector<8x8xbf16>
    %79 = arith.truncf %67 : vector<8x8xf32> to vector<8x8xbf16>
    %cst_23 = arith.constant dense<0.000000e+00> : vector<8x8xf32>
    %80 = tpu.matmul %78, %79, %cst_23 {dimension_numbers = #tpu.dot_dimension_numbers<[1], [0], [0], [1], [0, 0, 1, 1], [], []>} : vector<8x8xbf16>, vector<8x8xbf16>, vector<8x8xf32> -> vector<8x8xf32>
    %81 = tpu.reciprocal %77 {approx = true} : vector<8x1xf32> -> vector<8x1xf32>
    %82 = vector.broadcast %81 : vector<8x1xf32> to vector<8x8xf32>
    %83 = arith.mulf %80, %82 : vector<8x8xf32>
    %c0_24 = arith.constant 0 : index
    %c24 = arith.constant 24 : index
    %84 = vector.load %arg6[%c0_24, %c24] : memref<16x32xf32, #tpu.memory_space<vmem>>, vector<8x8xf32>
    tpu.vector_store %arg6[%c0_24, %c24], %83 {strides = array<i32>} : memref<16x32xf32, #tpu.memory_space<vmem>>, vector<8x8xf32>,
    %85 = vector.extract_strided_slice %4 {offsets = [8, 0], sizes = [8, 8], strides = [1, 1]} : vector<16x96xf32> to vector<8x8xf32>
    %86 = vector.extract_strided_slice %4 {offsets = [8, 32], sizes = [8, 8], strides = [1, 1]} : vector<16x96xf32> to vector<8x8xf32>
    %87 = vector.extract_strided_slice %4 {offsets = [8, 64], sizes = [8, 8], strides = [1, 1]} : vector<16x96xf32> to vector<8x8xf32>
    %88 = arith.truncf %85 : vector<8x8xf32> to vector<8x8xbf16>
    %89 = arith.truncf %86 : vector<8x8xf32> to vector<8x8xbf16>
    %cst_25 = arith.constant dense<0.000000e+00> : vector<8x8xf32>
    %90 = tpu.matmul %88, %89, %cst_25 {dimension_numbers = #tpu.dot_dimension_numbers<[1], [1], [0], [0], [0, 0, 1, 0], [], []>} : vector<8x8xbf16>, vector<8x8xbf16>, vector<8x8xf32> -> vector<8x8xf32>
    %cst_26 = arith.constant dense<0xFF800000> : vector<8xf32>
    %91 = vector.multi_reduction <maximumf>, %90, %cst_26 [1] : vector<8x8xf32> to vector<8xf32>
    %92 = vector.shape_cast %91 : vector<8xf32> to vector<8x1xf32>
    %93 = vector.broadcast %92 : vector<8x1xf32> to vector<8x8xf32>
    %94 = arith.subf %90, %93 : vector<8x8xf32>
    %95 = math.exp %94 : vector<8x8xf32>
    %cst_27 = arith.constant dense<0.000000e+00> : vector<8xf32>
    %96 = vector.multi_reduction <add>, %95, %cst_27 [1] : vector<8x8xf32> to vector<8xf32>
    %97 = vector.shape_cast %96 : vector<8xf32> to vector<8x1xf32>
    %98 = arith.truncf %95 : vector<8x8xf32> to vector<8x8xbf16>
    %99 = arith.truncf %87 : vector<8x8xf32> to vector<8x8xbf16>
    %cst_28 = arith.constant dense<0.000000e+00> : vector<8x8xf32>
    %100 = tpu.matmul %98, %99, %cst_28 {dimension_numbers = #tpu.dot_dimension_numbers<[1], [0], [0], [1], [0, 0, 1, 1], [], []>} : vector<8x8xbf16>, vector<8x8xbf16>, vector<8x8xf32> -> vector<8x8xf32>
    %101 = tpu.reciprocal %97 {approx = true} : vector<8x1xf32> -> vector<8x1xf32>
    %102 = vector.broadcast %101 : vector<8x1xf32> to vector<8x8xf32>
    %103 = arith.mulf %100, %102 : vector<8x8xf32>
    %c8_29 = arith.constant 8 : index
    %c0_30 = arith.constant 0 : index
    %104 = vector.load %arg6[%c8_29, %c0_30] : memref<16x32xf32, #tpu.memory_space<vmem>>, vector<8x8xf32>
    tpu.vector_store %arg6[%c8_29, %c0_30], %103 {strides = array<i32>} : memref<16x32xf32, #tpu.memory_space<vmem>>, vector<8x8xf32>,
    %105 = vector.extract_strided_slice %4 {offsets = [8, 8], sizes = [8, 8], strides = [1, 1]} : vector<16x96xf32> to vector<8x8xf32>
    %106 = vector.extract_strided_slice %4 {offsets = [8, 40], sizes = [8, 8], strides = [1, 1]} : vector<16x96xf32> to vector<8x8xf32>
    %107 = vector.extract_strided_slice %4 {offsets = [8, 72], sizes = [8, 8], strides = [1, 1]} : vector<16x96xf32> to vector<8x8xf32>
    %108 = arith.truncf %105 : vector<8x8xf32> to vector<8x8xbf16>
    %109 = arith.truncf %106 : vector<8x8xf32> to vector<8x8xbf16>
    %cst_31 = arith.constant dense<0.000000e+00> : vector<8x8xf32>
    %110 = tpu.matmul %108, %109, %cst_31 {dimension_numbers = #tpu.dot_dimension_numbers<[1], [1], [0], [0], [0, 0, 1, 0], [], []>} : vector<8x8xbf16>, vector<8x8xbf16>, vector<8x8xf32> -> vector<8x8xf32>
    %cst_32 = arith.constant dense<0xFF800000> : vector<8xf32>
    %111 = vector.multi_reduction <maximumf>, %110, %cst_32 [1] : vector<8x8xf32> to vector<8xf32>
    %112 = vector.shape_cast %111 : vector<8xf32> to vector<8x1xf32>
    %113 = vector.broadcast %112 : vector<8x1xf32> to vector<8x8xf32>
    %114 = arith.subf %110, %113 : vector<8x8xf32>
    %115 = math.exp %114 : vector<8x8xf32>
    %cst_33 = arith.constant dense<0.000000e+00> : vector<8xf32>
    %116 = vector.multi_reduction <add>, %115, %cst_33 [1] : vector<8x8xf32> to vector<8xf32>
    %117 = vector.shape_cast %116 : vector<8xf32> to vector<8x1xf32>
    %118 = arith.truncf %115 : vector<8x8xf32> to vector<8x8xbf16>
    %119 = arith.truncf %107 : vector<8x8xf32> to vector<8x8xbf16>
    %cst_34 = arith.constant dense<0.000000e+00> : vector<8x8xf32>
    %120 = tpu.matmul %118, %119, %cst_34 {dimension_numbers = #tpu.dot_dimension_numbers<[1], [0], [0], [1], [0, 0, 1, 1], [], []>} : vector<8x8xbf16>, vector<8x8xbf16>, vector<8x8xf32> -> vector<8x8xf32>
    %121 = tpu.reciprocal %117 {approx = true} : vector<8x1xf32> -> vector<8x1xf32>
    %122 = vector.broadcast %121 : vector<8x1xf32> to vector<8x8xf32>
    %123 = arith.mulf %120, %122 : vector<8x8xf32>
    %c8_35 = arith.constant 8 : index
    %c8_36 = arith.constant 8 : index
    %124 = vector.load %arg6[%c8_35, %c8_36] : memref<16x32xf32, #tpu.memory_space<vmem>>, vector<8x8xf32>
    tpu.vector_store %arg6[%c8_35, %c8_36], %123 {strides = array<i32>} : memref<16x32xf32, #tpu.memory_space<vmem>>, vector<8x8xf32>,
    %125 = vector.extract_strided_slice %4 {offsets = [8, 16], sizes = [8, 8], strides = [1, 1]} : vector<16x96xf32> to vector<8x8xf32>
    %126 = vector.extract_strided_slice %4 {offsets = [8, 48], sizes = [8, 8], strides = [1, 1]} : vector<16x96xf32> to vector<8x8xf32>
    %127 = vector.extract_strided_slice %4 {offsets = [8, 80], sizes = [8, 8], strides = [1, 1]} : vector<16x96xf32> to vector<8x8xf32>
    %128 = arith.truncf %125 : vector<8x8xf32> to vector<8x8xbf16>
    %129 = arith.truncf %126 : vector<8x8xf32> to vector<8x8xbf16>
    %cst_37 = arith.constant dense<0.000000e+00> : vector<8x8xf32>
    %130 = tpu.matmul %128, %129, %cst_37 {dimension_numbers = #tpu.dot_dimension_numbers<[1], [1], [0], [0], [0, 0, 1, 0], [], []>} : vector<8x8xbf16>, vector<8x8xbf16>, vector<8x8xf32> -> vector<8x8xf32>
    %cst_38 = arith.constant dense<0xFF800000> : vector<8xf32>
    %131 = vector.multi_reduction <maximumf>, %130, %cst_38 [1] : vector<8x8xf32> to vector<8xf32>
    %132 = vector.shape_cast %131 : vector<8xf32> to vector<8x1xf32>
    %133 = vector.broadcast %132 : vector<8x1xf32> to vector<8x8xf32>
    %134 = arith.subf %130, %133 : vector<8x8xf32>
    %135 = math.exp %134 : vector<8x8xf32>
    %cst_39 = arith.constant dense<0.000000e+00> : vector<8xf32>
    %136 = vector.multi_reduction <add>, %135, %cst_39 [1] : vector<8x8xf32> to vector<8xf32>
    %137 = vector.shape_cast %136 : vector<8xf32> to vector<8x1xf32>
    %138 = arith.truncf %135 : vector<8x8xf32> to vector<8x8xbf16>
    %139 = arith.truncf %127 : vector<8x8xf32> to vector<8x8xbf16>
    %cst_40 = arith.constant dense<0.000000e+00> : vector<8x8xf32>
    %140 = tpu.matmul %138, %139, %cst_40 {dimension_numbers = #tpu.dot_dimension_numbers<[1], [0], [0], [1], [0, 0, 1, 1], [], []>} : vector<8x8xbf16>, vector<8x8xbf16>, vector<8x8xf32> -> vector<8x8xf32>
    %141 = tpu.reciprocal %137 {approx = true} : vector<8x1xf32> -> vector<8x1xf32>
    %142 = vector.broadcast %141 : vector<8x1xf32> to vector<8x8xf32>
    %143 = arith.mulf %140, %142 : vector<8x8xf32>
    %c8_41 = arith.constant 8 : index
    %c16_42 = arith.constant 16 : index
    %144 = vector.load %arg6[%c8_41, %c16_42] : memref<16x32xf32, #tpu.memory_space<vmem>>, vector<8x8xf32>
    tpu.vector_store %arg6[%c8_41, %c16_42], %143 {strides = array<i32>} : memref<16x32xf32, #tpu.memory_space<vmem>>, vector<8x8xf32>,
    %145 = vector.extract_strided_slice %4 {offsets = [8, 24], sizes = [8, 8], strides = [1, 1]} : vector<16x96xf32> to vector<8x8xf32>
    %146 = vector.extract_strided_slice %4 {offsets = [8, 56], sizes = [8, 8], strides = [1, 1]} : vector<16x96xf32> to vector<8x8xf32>
    %147 = vector.extract_strided_slice %4 {offsets = [8, 88], sizes = [8, 8], strides = [1, 1]} : vector<16x96xf32> to vector<8x8xf32>
    %148 = arith.truncf %145 : vector<8x8xf32> to vector<8x8xbf16>
    %149 = arith.truncf %146 : vector<8x8xf32> to vector<8x8xbf16>
    %cst_43 = arith.constant dense<0.000000e+00> : vector<8x8xf32>
    %150 = tpu.matmul %148, %149, %cst_43 {dimension_numbers = #tpu.dot_dimension_numbers<[1], [1], [0], [0], [0, 0, 1, 0], [], []>} : vector<8x8xbf16>, vector<8x8xbf16>, vector<8x8xf32> -> vector<8x8xf32>
    %cst_44 = arith.constant dense<0xFF800000> : vector<8xf32>
    %151 = vector.multi_reduction <maximumf>, %150, %cst_44 [1] : vector<8x8xf32> to vector<8xf32>
    %152 = vector.shape_cast %151 : vector<8xf32> to vector<8x1xf32>
    %153 = vector.broadcast %152 : vector<8x1xf32> to vector<8x8xf32>
    %154 = arith.subf %150, %153 : vector<8x8xf32>
    %155 = math.exp %154 : vector<8x8xf32>
    %cst_45 = arith.constant dense<0.000000e+00> : vector<8xf32>
    %156 = vector.multi_reduction <add>, %155, %cst_45 [1] : vector<8x8xf32> to vector<8xf32>
    %157 = vector.shape_cast %156 : vector<8xf32> to vector<8x1xf32>
    %158 = arith.truncf %155 : vector<8x8xf32> to vector<8x8xbf16>
    %159 = arith.truncf %147 : vector<8x8xf32> to vector<8x8xbf16>
    %cst_46 = arith.constant dense<0.000000e+00> : vector<8x8xf32>
    %160 = tpu.matmul %158, %159, %cst_46 {dimension_numbers = #tpu.dot_dimension_numbers<[1], [0], [0], [1], [0, 0, 1, 1], [], []>} : vector<8x8xbf16>, vector<8x8xbf16>, vector<8x8xf32> -> vector<8x8xf32>
    %161 = tpu.reciprocal %157 {approx = true} : vector<8x1xf32> -> vector<8x1xf32>
    %162 = vector.broadcast %161 : vector<8x1xf32> to vector<8x8xf32>
    %163 = arith.mulf %160, %162 : vector<8x8xf32>
    %c8_47 = arith.constant 8 : index
    %c24_48 = arith.constant 24 : index
    %164 = vector.load %arg6[%c8_47, %c24_48] : memref<16x32xf32, #tpu.memory_space<vmem>>, vector<8x8xf32>
    tpu.vector_store %arg6[%c8_47, %c24_48], %163 {strides = array<i32>} : memref<16x32xf32, #tpu.memory_space<vmem>>, vector<8x8xf32>,
    %c0_49 = arith.constant 0 : index
    %c0_50 = arith.constant 0 : index
    %165 = vector.load %arg6[%c0_49, %c0_50] : memref<16x32xf32, #tpu.memory_space<vmem>>, vector<16x32xf32>
    %166 = arith.truncf %165 : vector<16x32xf32> to vector<16x32xbf16>
    %c0_51 = arith.constant 0 : index
    %c0_52 = arith.constant 0 : index
    %167 = vector.load %arg3[%c0_51, %c0_52] : memref<32x32xbf16, #tpu.memory_space<vmem>>, vector<32x32xbf16>
    %cst_53 = arith.constant dense<0.000000e+00> : vector<16x32xf32>
    %168 = tpu.matmul %166, %167, %cst_53 {dimension_numbers = #tpu.dot_dimension_numbers<[1], [0], [0], [1], [0, 0, 1, 1], [], []>} : vector<16x32xbf16>, vector<32x32xbf16>, vector<16x32xf32> -> vector<16x32xf32>
    %c0_54 = arith.constant 0 : index
    %c0_55 = arith.constant 0 : index
    %169 = vector.load %arg4[%c0_54, %c0_55] : memref<1x32xf32, #tpu.memory_space<vmem>>, vector<1x32xf32>
    %170 = vector.broadcast %169 : vector<1x32xf32> to vector<16x32xf32>
    %171 = arith.addf %168, %170 : vector<16x32xf32>
    %172 = vector.shape_cast %171 : vector<16x32xf32> to vector<2x8x32xf32>
    %c0_56 = arith.constant 0 : index
    %c0_57 = arith.constant 0 : index
    %c0_58 = arith.constant 0 : index
    %173 = vector.load %arg5[%c0_56, %c0_57, %c0_58] : memref<2x8x32xf32, #tpu.memory_space<vmem>>, vector<2x8x32xf32>
    tpu.vector_store %arg5[%c0_56, %c0_57, %c0_58], %172 {strides = array<i32>} : memref<2x8x32xf32, #tpu.memory_space<vmem>>, vector<2x8x32xf32>,
    return
  }
  func.func @transform_0(%arg0: i32) -> (i32, i32, i32) {
    %c0_i32 = arith.constant 0 : i32
    %c0_i32_0 = arith.constant 0 : i32
    %c0_i32_1 = arith.constant 0 : i32
    return %arg0, %c0_i32, %c0_i32_0 : i32, i32, i32
  }
  func.func @transform_1(%arg0: i32) -> (i32, i32) {
    %c0_i32 = arith.constant 0 : i32
    %c0_i32_0 = arith.constant 0 : i32
    %c0_i32_1 = arith.constant 0 : i32
    return %c0_i32, %c0_i32_0 : i32, i32
  }
  func.func @transform_2(%arg0: i32) -> (i32, i32) {
    %c0_i32 = arith.constant 0 : i32
    %c0_i32_0 = arith.constant 0 : i32
    %c0_i32_1 = arith.constant 0 : i32
    return %c0_i32, %c0_i32_0 : i32, i32
  }
  func.func @transform_3(%arg0: i32) -> (i32, i32) {
    %c0_i32 = arith.constant 0 : i32
    %c0_i32_0 = arith.constant 0 : i32
    %c0_i32_1 = arith.constant 0 : i32
    return %c0_i32, %c0_i32_0 : i32, i32
  }
  func.func @transform_4(%arg0: i32) -> (i32, i32, i32) {
    %c0_i32 = arith.constant 0 : i32
    %c0_i32_0 = arith.constant 0 : i32
    %c0_i32_1 = arith.constant 0 : i32
    return %arg0, %c0_i32, %c0_i32_0 : i32, i32, i32
  }
}

</mosaic_0001>

<llo_original>
// kernel: tpu_custom_call.1
$region0: #{tpu_custom_call.1}
  #allocation0 [shape = 'u32[]', space=smem, size = 0x4, offset = 0x4, fixed_abs, tag = 'smem constant byte address 0x4 - core index']
  #allocation1 [shape = 'u32[144,128]{1,0:T(1,128)}', space=vmem, size = 0x12000, scoped, tag = 'internal scratch']
  #allocation2 [shape = 'f32[16,32]{1,0:T(8,128)}', space=vmem, size = 0x2000, scoped, tag = 'scratch operand']
  %s0 = inlined_call_operand.hbm [shape: f32[2,8,32], index: 0, kind: input, shape index: {}]
  %s1 = inlined_call_operand.hbm [shape: bf16[32,96], index: 1, kind: input, shape index: {}]
  %s2 = inlined_call_operand.hbm [shape: bf16[32,32], index: 2, kind: input, shape index: {}]
  %s3 = inlined_call_operand.vmem [shape: f32[1,32], index: 3, kind: input, shape index: {}]
  %s4 = inlined_call_operand.hbm [shape: f32[2,8,32], index: 4, kind: output, shape index: {}]
  %s5 = sld [smem:[#allocation0]]
  $region38: #{tpu_custom_call.1} parent=0
    _
  %s7 = ssub.s32 1, %s5
  %s8 = scalar_select 0, %s7, %s5
  $region1: #{tpu_custom_call.1} parent=0
    #allocation3 [shape = 'u8[8192]{0}', space=vmem, size = 0x2000, scoped, tag = 'input window, operand 0, single buffered']
    #allocation4 [shape = 's32[1]{0}', space=sflag, size = 0x4, scoped, tag = 'scoped memory for tpu_custom_call.1']
    #allocation5 [shape = 's32[1]{0}', space=sflag, size = 0x4, scoped, tag = 'scoped memory for tpu_custom_call.1']
    #allocation6 [shape = 'u8[8192]{0}', space=vmem, size = 0x2000, scoped, tag = 'input window, operand 1, single buffered']
    #allocation7 [shape = 's32[1]{0}', space=sflag, size = 0x4, scoped, tag = 'scoped memory for tpu_custom_call.1']
    #allocation8 [shape = 'u8[8192]{0}', space=vmem, size = 0x2000, scoped, tag = 'input window, operand 2, single buffered']
    #allocation9 [shape = 'u8[8192]{0}', space=vmem, size = 0x2000, scoped, tag = 'output window, operand 0, single buffered']
    %9 = vsyncpa [#allocation4], 0
    %10 = vsyncpa [#allocation7], 0
    %11 = vsyncpa [#allocation5], 0
    // Predicated region
    $region2: #{tpu_custom_call.1} parent=1 // pred_check
      _
    $region3: #{tpu_custom_call.1} parent=1 // pred_check_branch
      %13 = sbr.rel (0) target = $region5
    $region4: #{tpu_custom_call.1} parent=1 // pred_region
      %s15 = ssub.s32 256, 256
      %16 = vsyncadd [#allocation4], %s15
      %s17 = sshll.u32 [#allocation3], 4
      %s18 = int_to_ptr.vmem [resolvable:$true] %s17
      %23 = dma.hbm_to_vmem [thread:$0]  %s0, 256, %s18, [#allocation4], 128, 128, 8
    $region5: #{tpu_custom_call.1} parent=1 // pred_fallthru
      _
    // Predicated region
    $region6: #{tpu_custom_call.1} parent=1 // pred_check
      _
    $region7: #{tpu_custom_call.1} parent=1 // pred_check_branch
      %25 = sbr.rel (0) target = $region9
    $region8: #{tpu_custom_call.1} parent=1 // pred_region
      %s27 = ssub.s32 256, 256
      %28 = vsyncadd [#allocation7], %s27
      %s29 = sshll.u32 [#allocation6], 4
      %s30 = int_to_ptr.vmem [resolvable:$true] %s29
      %35 = dma.hbm_to_vmem [thread:$0]  %s1, 256, %s30, [#allocation7], 64, 64, 4
    $region9: #{tpu_custom_call.1} parent=1 // pred_fallthru
      _
    // Predicated region
    $region10: #{tpu_custom_call.1} parent=1 // pred_check
      _
    $region11: #{tpu_custom_call.1} parent=1 // pred_check_branch
      %37 = sbr.rel (0) target = $region13
    $region12: #{tpu_custom_call.1} parent=1 // pred_region
      %s39 = ssub.s32 256, 256
      %40 = vsyncadd [#allocation7], %s39
      %s41 = sshll.u32 [#allocation8], 4
      %s42 = int_to_ptr.vmem [resolvable:$true] %s41
      %47 = dma.hbm_to_vmem [thread:$0]  %s2, 256, %s42, [#allocation7], 64, 64, 4
    $region13: #{tpu_custom_call.1} parent=1 // pred_fallthru
      _
    // Predicated region
    $region14: #{tpu_custom_call.1} parent=1 // pred_check
      _
    $region15: #{tpu_custom_call.1} parent=1 // pred_check_branch
      %49 = sbr.rel (0) target = $region17
    $region16: #{tpu_custom_call.1} parent=1 // pred_region
      _
    $region17: #{tpu_custom_call.1} parent=1 // pred_fallthru
      _
    // Predicated region
    $region18: #{tpu_custom_call.1} parent=1 // pred_check
      _
    $region19: #{tpu_custom_call.1} parent=1 // pred_check_branch
      %51 = sbr.rel (0) target = $region21
    $region20: #{tpu_custom_call.1} parent=1 // pred_region
      %52 = dma.done [#allocation4], 256
    $region21: #{tpu_custom_call.1} parent=1 // pred_fallthru
      _
    // Predicated region
    $region22: #{tpu_custom_call.1} parent=1 // pred_check
      _
    $region23: #{tpu_custom_call.1} parent=1 // pred_check_branch
      %54 = sbr.rel (0) target = $region25
    $region24: #{tpu_custom_call.1} parent=1 // pred_region
      %55 = dma.done [#allocation7], 256
    $region25: #{tpu_custom_call.1} parent=1 // pred_fallthru
      _
    // Predicated region
    $region26: #{tpu_custom_call.1} parent=1 // pred_check
      _
    $region27: #{tpu_custom_call.1} parent=1 // pred_check_branch
      %57 = sbr.rel (0) target = $region29
    $region28: #{tpu_custom_call.1} parent=1 // pred_region
      %58 = dma.done [#allocation7], 256
    $region29: #{tpu_custom_call.1} parent=1 // pred_fallthru
      _
    %v60 = vld [vmem:[#allocation3] sm:$0xff]
    %v61 = vld [vmem:[#allocation3 + $0x8] sm:$0xff]
    %v62 = vpack.c.bf16 %v61, %v60
    %v63 = vld [vmem:[#allocation6] sm:$0xf]
    %v64 = vld [vmem:[#allocation6 + $0x4] sm:$0xf]
    %v65 = vld [vmem:[#allocation6 + $0x8] sm:$0xf]
    %v66 = vld [vmem:[#allocation6 + $0xc] sm:$0xf]
    %v71 = vunpack.c.l.b16 %v63
    %v72 = vunpack.c.l.b16 %v64
    %v73 = vunpack.c.l.b16 %v65
    %v74 = vunpack.c.l.b16 %v66
    %v75 = vpack.c.b16 %v72, %v71
    %v76 = vpack.c.b16 %v74, %v73
    %vm79 = vcmask 261120
    %v81 = vsel %vm79, %v62, 0
    %83 = vmatprep.subr.bf16.mxu0 0
    %84 = vmatpush1.bf16.msra.mxu0 0
    %85 = vmatprep.subr.bf16.mxu0 0
    %86 = vmatpush1.bf16.msra.mxu0 0
    %87 = vmatprep.subr.bf16.mxu0 0
    %88 = vmatpush1.bf16.msra.mxu0 0
    %89 = vmatprep.subr.bf16.mxu0 0
    %90 = vmatpush1.bf16.msra.mxu0 0
    %91 = vmatprep.subr.bf16.mxu0 0
    %92 = vmatpush1.bf16.msra.mxu0 0
    %93 = vmatprep.subr.bf16.mxu0 0
    %94 = vmatpush1.bf16.msra.mxu0 0
    %95 = vmatprep.subr.bf16.mxu0 0
    %96 = vmatpush1.bf16.msra.mxu0 %v76
    %97 = vmatprep.subr.bf16.mxu0 0
    %98 = vmatpush1.bf16.msra.mxu0 %v75
    %99 = vmatprep.subr.bf16.mxu0 0
    %100 = vmatpush2.bf16.msra.mxu0 0
    %101 = vmatprep.subr.bf16.mxu0 0
    %102 = vmatpush2.bf16.msra.mxu0 0
    %103 = vmatprep.subr.bf16.mxu0 0
    %104 = vmatpush2.bf16.msra.mxu0 0
    %105 = vmatprep.subr.bf16.mxu0 0
    %106 = vmatpush2.bf16.msra.mxu0 0
    %107 = vmatprep.subr.bf16.mxu0 0
    %108 = vmatpush2.bf16.msra.mxu0 0
    %109 = vmatprep.subr.bf16.mxu0 0
    %110 = vmatpush2.bf16.msra.mxu0 0
    %111 = vmatprep.subr.bf16.mxu0 0
    %112 = vmatpush2.bf16.msra.mxu0 0
    %113 = vmatprep.subr.bf16.mxu0 0
    %114 = vmatpush2.bf16.msra.mxu0 0
    %115 = vmatprep.mubr.bf16.mxu0 0
    %116 = vmatmul.mubr.bf16.gmra.mxu0 %v81
    %v117 = vpop.f32.mrf.mxu0
    %v118 = vadd.f32 0.0, %v117
    %v119 = vpop.f32.mrf.mxu0
    %v120 = vpop.f32.mrf.mxu0
    %v121 = vadd.f32 0.0, %v120
    %v122 = vpop.f32.mrf.mxu0
    %123 = vdwg.mxu0
    %v124 = vpack.c.bf16 %v118, %v118
    %126 = vrot.lane.b32.xlu0 %v124, 96
    %v127 = vpop.permute.xlu0 %126
    %vm128 = vcmask 64512
    %v130 = vsel %vm128, %v124, 0
    %v133 = vsel %vm128, %v127, 0
    %135 = vmatprep.subr.bf16.mxu0 0
    %136 = vmatpush1.bf16.xpose.msra.mxu0 0
    %137 = vmatprep.subr.bf16.mxu0 0
    %138 = vmatpush1.bf16.xpose.msra.mxu0 0
    %139 = vmatprep.subr.bf16.mxu0 0
    %140 = vmatpush1.bf16.xpose.msra.mxu0 0
    %141 = vmatprep.subr.bf16.mxu0 0
    %142 = vmatpush1.bf16.xpose.msra.mxu0 0
    %143 = vmatprep.subr.bf16.mxu0 0
    %144 = vmatpush1.bf16.xpose.msra.mxu0 0
    %145 = vmatprep.subr.bf16.mxu0 0
    %146 = vmatpush1.bf16.xpose.msra.mxu0 0
    %147 = vmatprep.subr.bf16.mxu0 0
    %148 = vmatpush1.bf16.xpose.msra.mxu0 0
    %149 = vmatprep.subr.bf16.mxu0 0
    %150 = vmatpush1.bf16.xpose.msra.mxu0 %v133
    %151 = vmatprep.subr.bf16.mxu0 0
    %152 = vmatpush2.bf16.xpose.msra.mxu0 0
    %153 = vmatprep.subr.bf16.mxu0 0
    %154 = vmatpush2.bf16.xpose.msra.mxu0 0
    %155 = vmatprep.subr.bf16.mxu0 0
    %156 = vmatpush2.bf16.xpose.msra.mxu0 0
    %157 = vmatprep.subr.bf16.mxu0 0
    %158 = vmatpush2.bf16.xpose.msra.mxu0 0
    %159 = vmatprep.subr.bf16.mxu0 0
    %160 = vmatpush2.bf16.xpose.msra.mxu0 0
    %161 = vmatprep.subr.bf16.mxu0 0
    %162 = vmatpush2.bf16.xpose.msra.mxu0 0
    %163 = vmatprep.subr.bf16.mxu0 0
    %164 = vmatpush2.bf16.xpose.msra.mxu0 0
    %165 = vmatprep.subr.bf16.mxu0 0
    %166 = vmatpush2.bf16.xpose.msra.mxu0 0
    %167 = vmatprep.mubr.bf16.mxu0 0
    %168 = vmatmul.mubr.bf16.gmra.mxu0 %v130
    %v169 = vpop.f32.mrf.mxu0
    %v170 = vadd.f32 0.0, %v169
    %v171 = vpop.f32.mrf.mxu0
    %v172 = vpop.f32.mrf.mxu0
    %v173 = vpop.f32.mrf.mxu0
    %174 = vdwg.mxu0
    %v175 = vsel %vm128, %v170, -inf
    %176 = vmax.xlane.f32.xlu0 %v175
    %v177 = vpop.xlane.xlu0 %176
    %v178 = vsub.f32 %v170, %v177
    %v179 = vmul.f32 %v178, 1.442695
    %v180 = vpow.pop %v179
    %v181 = vsel %vm128, %v180, 0.0
    %182 = vadd.xlane.f32.xlu0 %v181
    %v183 = vpop.xlane.xlu0 %182
    %v184 = vpack.c.bf16 %v180, %v180
    %185 = vrot.lane.b32.xlu0 %v124, 64
    %v186 = vpop.permute.xlu0 %185
    %v188 = vsel %vm128, %v184, 0
    %vm190 = vcmask 1043456
    %v192 = vsel %vm190, %v186, 0
    %194 = vmatprep.subr.bf16.mxu0 0
    %195 = vmatpush1.bf16.msra.mxu0 0
    %196 = vmatprep.subr.bf16.mxu0 0
    %197 = vmatpush1.bf16.msra.mxu0 0
    %198 = vmatprep.subr.bf16.mxu0 0
    %199 = vmatpush1.bf16.msra.mxu0 0
    %200 = vmatprep.subr.bf16.mxu0 0
    %201 = vmatpush1.bf16.msra.mxu0 0
    %202 = vmatprep.subr.bf16.mxu0 0
    %203 = vmatpush1.bf16.msra.mxu0 0
    %204 = vmatprep.subr.bf16.mxu0 0
    %205 = vmatpush1.bf16.msra.mxu0 0
    %206 = vmatprep.subr.bf16.mxu0 0
    %207 = vmatpush1.bf16.msra.mxu0 0
    %208 = vmatprep.subr.bf16.mxu0 0
    %209 = vmatpush1.bf16.msra.mxu0 %v192
    %210 = vmatprep.subr.bf16.mxu0 0
    %211 = vmatpush2.bf16.msra.mxu0 0
    %212 = vmatprep.subr.bf16.mxu0 0
    %213 = vmatpush2.bf16.msra.mxu0 0
    %214 = vmatprep.subr.bf16.mxu0 0
    %215 = vmatpush2.bf16.msra.mxu0 0
    %216 = vmatprep.subr.bf16.mxu0 0
    %217 = vmatpush2.bf16.msra.mxu0 0
    %218 = vmatprep.subr.bf16.mxu0 0
    %219 = vmatpush2.bf16.msra.mxu0 0
    %220 = vmatprep.subr.bf16.mxu0 0
    %221 = vmatpush2.bf16.msra.mxu0 0
    %222 = vmatprep.subr.bf16.mxu0 0
    %223 = vmatpush2.bf16.msra.mxu0 0
    %224 = vmatprep.subr.bf16.mxu0 0
    %225 = vmatpush2.bf16.msra.mxu0 0
    %226 = vmatprep.mubr.bf16.mxu0 0
    %227 = vmatmul.mubr.bf16.gmra.mxu0 %v188
    %v228 = vpop.f32.mrf.mxu0
    %v229 = vadd.f32 0.0, %v228
    %v230 = vpop.f32.mrf.mxu0
    %v231 = vpop.f32.mrf.mxu0
    %v232 = vpop.f32.mrf.mxu0
    %233 = vdwg.mxu0
    %v234 = vrcp.pop %v183
    %v235 = vmul.f32 %v229, %v234
    %236 = vst.msk [vmem:[#allocation2] sm:$0xff] %vm128, %v235
    %237 = vrot.lane.b32.xlu0 %v124, 120
    %v238 = vpop.permute.xlu0 %237
    %239 = vrot.lane.b32.xlu0 %v124, 88
    %v240 = vpop.permute.xlu0 %239
    %v242 = vsel %vm128, %v238, 0
    %v245 = vsel %vm128, %v240, 0
    %247 = vmatprep.subr.bf16.mxu0 0
    %248 = vmatpush1.bf16.xpose.msra.mxu0 0
    %249 = vmatprep.subr.bf16.mxu0 0
    %250 = vmatpush1.bf16.xpose.msra.mxu0 0
    %251 = vmatprep.subr.bf16.mxu0 0
    %252 = vmatpush1.bf16.xpose.msra.mxu0 0
    %253 = vmatprep.subr.bf16.mxu0 0
    %254 = vmatpush1.bf16.xpose.msra.mxu0 0
    %255 = vmatprep.subr.bf16.mxu0 0
    %256 = vmatpush1.bf16.xpose.msra.mxu0 0
    %257 = vmatprep.subr.bf16.mxu0 0
    %258 = vmatpush1.bf16.xpose.msra.mxu0 0
    %259 = vmatprep.subr.bf16.mxu0 0
    %260 = vmatpush1.bf16.xpose.msra.mxu0 0
    %261 = vmatprep.subr.bf16.mxu0 0
    %262 = vmatpush1.bf16.xpose.msra.mxu0 %v245
    %263 = vmatprep.subr.bf16.mxu0 0
    %264 = vmatpush2.bf16.xpose.msra.mxu0 0
    %265 = vmatprep.subr.bf16.mxu0 0
    %266 = vmatpush2.bf16.xpose.msra.mxu0 0
    %267 = vmatprep.subr.bf16.mxu0 0
    %268 = vmatpush2.bf16.xpose.msra.mxu0 0
    %269 = vmatprep.subr.bf16.mxu0 0
    %270 = vmatpush2.bf16.xpose.msra.mxu0 0
    %271 = vmatprep.subr.bf16.mxu0 0
    %272 = vmatpush2.bf16.xpose.msra.mxu0 0
    %273 = vmatprep.subr.bf16.mxu0 0
    %274 = vmatpush2.bf16.xpose.msra.mxu0 0
    %275 = vmatprep.subr.bf16.mxu0 0
    %276 = vmatpush2.bf16.xpose.msra.mxu0 0
    %277 = vmatprep.subr.bf16.mxu0 0
    %278 = vmatpush2.bf16.xpose.msra.mxu0 0
    %279 = vmatprep.mubr.bf16.mxu0 0
    %280 = vmatmul.mubr.bf16.gmra.mxu0 %v242
    %v281 = vpop.f32.mrf.mxu0
    %v282 = vadd.f32 0.0, %v281
    %v283 = vpop.f32.mrf.mxu0
    %v284 = vpop.f32.mrf.mxu0
    %v285 = vpop.f32.mrf.mxu0
    %286 = vdwg.mxu0
    %v287 = vsel %vm128, %v282, -inf
    %288 = vmax.xlane.f32.xlu0 %v287
    %v289 = vpop.xlane.xlu0 %288
    %v290 = vsub.f32 %v282, %v289
    %v291 = vmul.f32 %v290, 1.442695
    %v292 = vpow.pop %v291
    %v293 = vsel %vm128, %v292, 0.0
    %294 = vadd.xlane.f32.xlu0 %v293
    %v295 = vpop.xlane.xlu0 %294
    %v296 = vpack.c.bf16 %v292, %v292
    %297 = vrot.lane.b32.xlu0 %v124, 56
    %v298 = vpop.permute.xlu0 %297
    %v300 = vsel %vm128, %v296, 0
    %v303 = vsel %vm190, %v298, 0
    %305 = vmatprep.subr.bf16.mxu0 0
    %306 = vmatpush1.bf16.msra.mxu0 0
    %307 = vmatprep.subr.bf16.mxu0 0
    %308 = vmatpush1.bf16.msra.mxu0 0
    %309 = vmatprep.subr.bf16.mxu0 0
    %310 = vmatpush1.bf16.msra.mxu0 0
    %311 = vmatprep.subr.bf16.mxu0 0
    %312 = vmatpush1.bf16.msra.mxu0 0
    %313 = vmatprep.subr.bf16.mxu0 0
    %314 = vmatpush1.bf16.msra.mxu0 0
    %315 = vmatprep.subr.bf16.mxu0 0
    %316 = vmatpush1.bf16.msra.mxu0 0
    %317 = vmatprep.subr.bf16.mxu0 0
    %318 = vmatpush1.bf16.msra.mxu0 0
    %319 = vmatprep.subr.bf16.mxu0 0
    %320 = vmatpush1.bf16.msra.mxu0 %v303
    %321 = vmatprep.subr.bf16.mxu0 0
    %322 = vmatpush2.bf16.msra.mxu0 0
    %323 = vmatprep.subr.bf16.mxu0 0
    %324 = vmatpush2.bf16.msra.mxu0 0
    %325 = vmatprep.subr.bf16.mxu0 0
    %326 = vmatpush2.bf16.msra.mxu0 0
    %327 = vmatprep.subr.bf16.mxu0 0
    %328 = vmatpush2.bf16.msra.mxu0 0
    %329 = vmatprep.subr.bf16.mxu0 0
    %330 = vmatpush2.bf16.msra.mxu0 0
    %331 = vmatprep.subr.bf16.mxu0 0
    %332 = vmatpush2.bf16.msra.mxu0 0
    %333 = vmatprep.subr.bf16.mxu0 0
    %334 = vmatpush2.bf16.msra.mxu0 0
    %335 = vmatprep.subr.bf16.mxu0 0
    %336 = vmatpush2.bf16.msra.mxu0 0
    %337 = vmatprep.mubr.bf16.mxu0 0
    %338 = vmatmul.mubr.bf16.gmra.mxu0 %v300
    %v339 = vpop.f32.mrf.mxu0
    %v340 = vadd.f32 0.0, %v339
    %v341 = vpop.f32.mrf.mxu0
    %v342 = vpop.f32.mrf.mxu0
    %v343 = vpop.f32.mrf.mxu0
    %344 = vdwg.mxu0
    %v345 = vrcp.pop %v295
    %v346 = vmul.f32 %v340, %v345
    %348 = vrot.lane.b32.xlu0 %v346, 8
    %v349 = vpop.permute.xlu0 %348
    %vm351 = vcmask 130112
    %352 = vst.msk [vmem:[#allocation2] sm:$0xff] %vm351, %v349
    %353 = vrot.lane.b32.xlu0 %v124, 112
    %v354 = vpop.permute.xlu0 %353
    %355 = vrot.lane.b32.xlu0 %v124, 80
    %v356 = vpop.permute.xlu0 %355
    %v358 = vsel %vm128, %v354, 0
    %v361 = vsel %vm128, %v356, 0
    %363 = vmatprep.subr.bf16.mxu0 0
    %364 = vmatpush1.bf16.xpose.msra.mxu0 0
    %365 = vmatprep.subr.bf16.mxu0 0
    %366 = vmatpush1.bf16.xpose.msra.mxu0 0
    %367 = vmatprep.subr.bf16.mxu0 0
    %368 = vmatpush1.bf16.xpose.msra.mxu0 0
    %369 = vmatprep.subr.bf16.mxu0 0
    %370 = vmatpush1.bf16.xpose.msra.mxu0 0
    %371 = vmatprep.subr.bf16.mxu0 0
    %372 = vmatpush1.bf16.xpose.msra.mxu0 0
    %373 = vmatprep.subr.bf16.mxu0 0
    %374 = vmatpush1.bf16.xpose.msra.mxu0 0
    %375 = vmatprep.subr.bf16.mxu0 0
    %376 = vmatpush1.bf16.xpose.msra.mxu0 0
    %377 = vmatprep.subr.bf16.mxu0 0
    %378 = vmatpush1.bf16.xpose.msra.mxu0 %v361
    %379 = vmatprep.subr.bf16.mxu0 0
    %380 = vmatpush2.bf16.xpose.msra.mxu0 0
    %381 = vmatprep.subr.bf16.mxu0 0
    %382 = vmatpush2.bf16.xpose.msra.mxu0 0
    %383 = vmatprep.subr.bf16.mxu0 0
    %384 = vmatpush2.bf16.xpose.msra.mxu0 0
    %385 = vmatprep.subr.bf16.mxu0 0
    %386 = vmatpush2.bf16.xpose.msra.mxu0 0
    %387 = vmatprep.subr.bf16.mxu0 0
    %388 = vmatpush2.bf16.xpose.msra.mxu0 0
    %389 = vmatprep.subr.bf16.mxu0 0
    %390 = vmatpush2.bf16.xpose.msra.mxu0 0
    %391 = vmatprep.subr.bf16.mxu0 0
    %392 = vmatpush2.bf16.xpose.msra.mxu0 0
    %393 = vmatprep.subr.bf16.mxu0 0
    %394 = vmatpush2.bf16.xpose.msra.mxu0 0
    %395 = vmatprep.mubr.bf16.mxu0 0
    %396 = vmatmul.mubr.bf16.gmra.mxu0 %v358
    %v397 = vpop.f32.mrf.mxu0
    %v398 = vadd.f32 0.0, %v397
    %v399 = vpop.f32.mrf.mxu0
    %v400 = vpop.f32.mrf.mxu0
    %v401 = vpop.f32.mrf.mxu0
    %402 = vdwg.mxu0
    %v403 = vsel %vm128, %v398, -inf
    %404 = vmax.xlane.f32.xlu0 %v403
    %v405 = vpop.xlane.xlu0 %404
    %v406 = vsub.f32 %v398, %v405
    %v407 = vmul.f32 %v406, 1.442695
    %v408 = vpow.pop %v407
    %v409 = vsel %vm128, %v408, 0.0
    %410 = vadd.xlane.f32.xlu0 %v409
    %v411 = vpop.xlane.xlu0 %410
    %v412 = vpack.c.bf16 %v408, %v408
    %413 = vrot.lane.b32.xlu0 %v124, 48
    %v414 = vpop.permute.xlu0 %413
    %v416 = vsel %vm128, %v412, 0
    %v419 = vsel %vm190, %v414, 0
    %421 = vmatprep.subr.bf16.mxu0 0
    %422 = vmatpush1.bf16.msra.mxu0 0
    %423 = vmatprep.subr.bf16.mxu0 0
    %424 = vmatpush1.bf16.msra.mxu0 0
    %425 = vmatprep.subr.bf16.mxu0 0
    %426 = vmatpush1.bf16.msra.mxu0 0
    %427 = vmatprep.subr.bf16.mxu0 0
    %428 = vmatpush1.bf16.msra.mxu0 0
    %429 = vmatprep.subr.bf16.mxu0 0
    %430 = vmatpush1.bf16.msra.mxu0 0
    %431 = vmatprep.subr.bf16.mxu0 0
    %432 = vmatpush1.bf16.msra.mxu0 0
    %433 = vmatprep.subr.bf16.mxu0 0
    %434 = vmatpush1.bf16.msra.mxu0 0
    %435 = vmatprep.subr.bf16.mxu0 0
    %436 = vmatpush1.bf16.msra.mxu0 %v419
    %437 = vmatprep.subr.bf16.mxu0 0
    %438 = vmatpush2.bf16.msra.mxu0 0
    %439 = vmatprep.subr.bf16.mxu0 0
    %440 = vmatpush2.bf16.msra.mxu0 0
    %441 = vmatprep.subr.bf16.mxu0 0
    %442 = vmatpush2.bf16.msra.mxu0 0
    %443 = vmatprep.subr.bf16.mxu0 0
    %444 = vmatpush2.bf16.msra.mxu0 0
    %445 = vmatprep.subr.bf16.mxu0 0
    %446 = vmatpush2.bf16.msra.mxu0 0
    %447 = vmatprep.subr.bf16.mxu0 0
    %448 = vmatpush2.bf16.msra.mxu0 0
    %449 = vmatprep.subr.bf16.mxu0 0
    %450 = vmatpush2.bf16.msra.mxu0 0
    %451 = vmatprep.subr.bf16.mxu0 0
    %452 = vmatpush2.bf16.msra.mxu0 0
    %453 = vmatprep.mubr.bf16.mxu0 0
    %454 = vmatmul.mubr.bf16.gmra.mxu0 %v416
    %v455 = vpop.f32.mrf.mxu0
    %v456 = vadd.f32 0.0, %v455
    %v457 = vpop.f32.mrf.mxu0
    %v458 = vpop.f32.mrf.mxu0
    %v459 = vpop.f32.mrf.mxu0
    %460 = vdwg.mxu0
    %v461 = vrcp.pop %v411
    %v462 = vmul.f32 %v456, %v461
    %464 = vrot.lane.b32.xlu0 %v462, 16
    %v465 = vpop.permute.xlu0 %464
    %vm467 = vcmask 195712
    %468 = vst.msk [vmem:[#allocation2] sm:$0xff] %vm467, %v465
    %469 = vrot.lane.b32.xlu0 %v124, 104
    %v470 = vpop.permute.xlu0 %469
    %471 = vrot.lane.b32.xlu0 %v124, 72
    %v472 = vpop.permute.xlu0 %471
    %v474 = vsel %vm128, %v470, 0
    %v477 = vsel %vm128, %v472, 0
    %479 = vmatprep.subr.bf16.mxu0 0
    %480 = vmatpush1.bf16.xpose.msra.mxu0 0
    %481 = vmatprep.subr.bf16.mxu0 0
    %482 = vmatpush1.bf16.xpose.msra.mxu0 0
    %483 = vmatprep.subr.bf16.mxu0 0
    %484 = vmatpush1.bf16.xpose.msra.mxu0 0
    %485 = vmatprep.subr.bf16.mxu0 0
    %486 = vmatpush1.bf16.xpose.msra.mxu0 0
    %487 = vmatprep.subr.bf16.mxu0 0
    %488 = vmatpush1.bf16.xpose.msra.mxu0 0
    %489 = vmatprep.subr.bf16.mxu0 0
    %490 = vmatpush1.bf16.xpose.msra.mxu0 0
    %491 = vmatprep.subr.bf16.mxu0 0
    %492 = vmatpush1.bf16.xpose.msra.mxu0 0
    %493 = vmatprep.subr.bf16.mxu0 0
    %494 = vmatpush1.bf16.xpose.msra.mxu0 %v477
    %495 = vmatprep.subr.bf16.mxu0 0
    %496 = vmatpush2.bf16.xpose.msra.mxu0 0
    %497 = vmatprep.subr.bf16.mxu0 0
    %498 = vmatpush2.bf16.xpose.msra.mxu0 0
    %499 = vmatprep.subr.bf16.mxu0 0
    %500 = vmatpush2.bf16.xpose.msra.mxu0 0
    %501 = vmatprep.subr.bf16.mxu0 0
    %502 = vmatpush2.bf16.xpose.msra.mxu0 0
    %503 = vmatprep.subr.bf16.mxu0 0
    %504 = vmatpush2.bf16.xpose.msra.mxu0 0
    %505 = vmatprep.subr.bf16.mxu0 0
    %506 = vmatpush2.bf16.xpose.msra.mxu0 0
    %507 = vmatprep.subr.bf16.mxu0 0
    %508 = vmatpush2.bf16.xpose.msra.mxu0 0
    %509 = vmatprep.subr.bf16.mxu0 0
    %510 = vmatpush2.bf16.xpose.msra.mxu0 0
    %511 = vmatprep.mubr.bf16.mxu0 0
    %512 = vmatmul.mubr.bf16.gmra.mxu0 %v474
    %v513 = vpop.f32.mrf.mxu0
    %v514 = vadd.f32 0.0, %v513
    %v515 = vpop.f32.mrf.mxu0
    %v516 = vpop.f32.mrf.mxu0
    %v517 = vpop.f32.mrf.mxu0
    %518 = vdwg.mxu0
    %v519 = vsel %vm128, %v514, -inf
    %520 = vmax.xlane.f32.xlu0 %v519
    %v521 = vpop.xlane.xlu0 %520
    %v522 = vsub.f32 %v514, %v521
    %v523 = vmul.f32 %v522, 1.442695
    %v524 = vpow.pop %v523
    %v525 = vsel %vm128, %v524, 0.0
    %526 = vadd.xlane.f32.xlu0 %v525
    %v527 = vpop.xlane.xlu0 %526
    %v528 = vpack.c.bf16 %v524, %v524
    %529 = vrot.lane.b32.xlu0 %v124, 40
    %v530 = vpop.permute.xlu0 %529
    %v532 = vsel %vm128, %v528, 0
    %v535 = vsel %vm190, %v530, 0
    %537 = vmatprep.subr.bf16.mxu0 0
    %538 = vmatpush1.bf16.msra.mxu0 0
    %539 = vmatprep.subr.bf16.mxu0 0
    %540 = vmatpush1.bf16.msra.mxu0 0
    %541 = vmatprep.subr.bf16.mxu0 0
    %542 = vmatpush1.bf16.msra.mxu0 0
    %543 = vmatprep.subr.bf16.mxu0 0
    %544 = vmatpush1.bf16.msra.mxu0 0
    %545 = vmatprep.subr.bf16.mxu0 0
    %546 = vmatpush1.bf16.msra.mxu0 0
    %547 = vmatprep.subr.bf16.mxu0 0
    %548 = vmatpush1.bf16.msra.mxu0 0
    %549 = vmatprep.subr.bf16.mxu0 0
    %550 = vmatpush1.bf16.msra.mxu0 0
    %551 = vmatprep.subr.bf16.mxu0 0
    %552 = vmatpush1.bf16.msra.mxu0 %v535
    %553 = vmatprep.subr.bf16.mxu0 0
    %554 = vmatpush2.bf16.msra.mxu0 0
    %555 = vmatprep.subr.bf16.mxu0 0
    %556 = vmatpush2.bf16.msra.mxu0 0
    %557 = vmatprep.subr.bf16.mxu0 0
    %558 = vmatpush2.bf16.msra.mxu0 0
    %559 = vmatprep.subr.bf16.mxu0 0
    %560 = vmatpush2.bf16.msra.mxu0 0
    %561 = vmatprep.subr.bf16.mxu0 0
    %562 = vmatpush2.bf16.msra.mxu0 0
    %563 = vmatprep.subr.bf16.mxu0 0
    %564 = vmatpush2.bf16.msra.mxu0 0
    %565 = vmatprep.subr.bf16.mxu0 0
    %566 = vmatpush2.bf16.msra.mxu0 0
    %567 = vmatprep.subr.bf16.mxu0 0
    %568 = vmatpush2.bf16.msra.mxu0 0
    %569 = vmatprep.mubr.bf16.mxu0 0
    %570 = vmatmul.mubr.bf16.gmra.mxu0 %v532
    %v571 = vpop.f32.mrf.mxu0
    %v572 = vadd.f32 0.0, %v571
    %v573 = vpop.f32.mrf.mxu0
    %v574 = vpop.f32.mrf.mxu0
    %v575 = vpop.f32.mrf.mxu0
    %576 = vdwg.mxu0
    %v577 = vrcp.pop %v527
    %v578 = vmul.f32 %v572, %v577
    %580 = vrot.lane.b32.xlu0 %v578, 24
    %v581 = vpop.permute.xlu0 %580
    %vm583 = vcmask 261312
    %584 = vst.msk [vmem:[#allocation2] sm:$0xff] %vm583, %v581
    %v585 = vpack.c.bf16 %v121, %v121
    %587 = vrot.lane.b32.xlu0 %v585, 96
    %v588 = vpop.permute.xlu0 %587
    %v590 = vsel %vm128, %v585, 0
    %v593 = vsel %vm128, %v588, 0
    %595 = vmatprep.subr.bf16.mxu0 0
    %596 = vmatpush1.bf16.xpose.msra.mxu0 0
    %597 = vmatprep.subr.bf16.mxu0 0
    %598 = vmatpush1.bf16.xpose.msra.mxu0 0
    %599 = vmatprep.subr.bf16.mxu0 0
    %600 = vmatpush1.bf16.xpose.msra.mxu0 0
    %601 = vmatprep.subr.bf16.mxu0 0
    %602 = vmatpush1.bf16.xpose.msra.mxu0 0
    %603 = vmatprep.subr.bf16.mxu0 0
    %604 = vmatpush1.bf16.xpose.msra.mxu0 0
    %605 = vmatprep.subr.bf16.mxu0 0
    %606 = vmatpush1.bf16.xpose.msra.mxu0 0
    %607 = vmatprep.subr.bf16.mxu0 0
    %608 = vmatpush1.bf16.xpose.msra.mxu0 0
    %609 = vmatprep.subr.bf16.mxu0 0
    %610 = vmatpush1.bf16.xpose.msra.mxu0 %v593
    %611 = vmatprep.subr.bf16.mxu0 0
    %612 = vmatpush2.bf16.xpose.msra.mxu0 0
    %613 = vmatprep.subr.bf16.mxu0 0
    %614 = vmatpush2.bf16.xpose.msra.mxu0 0
    %615 = vmatprep.subr.bf16.mxu0 0
    %616 = vmatpush2.bf16.xpose.msra.mxu0 0
    %617 = vmatprep.subr.bf16.mxu0 0
    %618 = vmatpush2.bf16.xpose.msra.mxu0 0
    %619 = vmatprep.subr.bf16.mxu0 0
    %620 = vmatpush2.bf16.xpose.msra.mxu0 0
    %621 = vmatprep.subr.bf16.mxu0 0
    %622 = vmatpush2.bf16.xpose.msra.mxu0 0
    %623 = vmatprep.subr.bf16.mxu0 0
    %624 = vmatpush2.bf16.xpose.msra.mxu0 0
    %625 = vmatprep.subr.bf16.mxu0 0
    %626 = vmatpush2.bf16.xpose.msra.mxu0 0
    %627 = vmatprep.mubr.bf16.mxu0 0
    %628 = vmatmul.mubr.bf16.gmra.mxu0 %v590
    %v629 = vpop.f32.mrf.mxu0
    %v630 = vadd.f32 0.0, %v629
    %v631 = vpop.f32.mrf.mxu0
    %v632 = vpop.f32.mrf.mxu0
    %v633 = vpop.f32.mrf.mxu0
    %634 = vdwg.mxu0
    %v635 = vsel %vm128, %v630, -inf
    %636 = vmax.xlane.f32.xlu0 %v635
    %v637 = vpop.xlane.xlu0 %636
    %v638 = vsub.f32 %v630, %v637
    %v639 = vmul.f32 %v638, 1.442695
    %v640 = vpow.pop %v639
    %v641 = vsel %vm128, %v640, 0.0
    %642 = vadd.xlane.f32.xlu0 %v641
    %v643 = vpop.xlane.xlu0 %642
    %v644 = vpack.c.bf16 %v640, %v640
    %645 = vrot.lane.b32.xlu0 %v585, 64
    %v646 = vpop.permute.xlu0 %645
    %v648 = vsel %vm128, %v644, 0
    %v651 = vsel %vm190, %v646, 0
    %653 = vmatprep.subr.bf16.mxu0 0
    %654 = vmatpush1.bf16.msra.mxu0 0
    %655 = vmatprep.subr.bf16.mxu0 0
    %656 = vmatpush1.bf16.msra.mxu0 0
    %657 = vmatprep.subr.bf16.mxu0 0
    %658 = vmatpush1.bf16.msra.mxu0 0
    %659 = vmatprep.subr.bf16.mxu0 0
    %660 = vmatpush1.bf16.msra.mxu0 0
    %661 = vmatprep.subr.bf16.mxu0 0
    %662 = vmatpush1.bf16.msra.mxu0 0
    %663 = vmatprep.subr.bf16.mxu0 0
    %664 = vmatpush1.bf16.msra.mxu0 0
    %665 = vmatprep.subr.bf16.mxu0 0
    %666 = vmatpush1.bf16.msra.mxu0 0
    %667 = vmatprep.subr.bf16.mxu0 0
    %668 = vmatpush1.bf16.msra.mxu0 %v651
    %669 = vmatprep.subr.bf16.mxu0 0
    %670 = vmatpush2.bf16.msra.mxu0 0
    %671 = vmatprep.subr.bf16.mxu0 0
    %672 = vmatpush2.bf16.msra.mxu0 0
    %673 = vmatprep.subr.bf16.mxu0 0
    %674 = vmatpush2.bf16.msra.mxu0 0
    %675 = vmatprep.subr.bf16.mxu0 0
    %676 = vmatpush2.bf16.msra.mxu0 0
    %677 = vmatprep.subr.bf16.mxu0 0
    %678 = vmatpush2.bf16.msra.mxu0 0
    %679 = vmatprep.subr.bf16.mxu0 0
    %680 = vmatpush2.bf16.msra.mxu0 0
    %681 = vmatprep.subr.bf16.mxu0 0
    %682 = vmatpush2.bf16.msra.mxu0 0
    %683 = vmatprep.subr.bf16.mxu0 0
    %684 = vmatpush2.bf16.msra.mxu0 0
    %685 = vmatprep.mubr.bf16.mxu0 0
    %686 = vmatmul.mubr.bf16.gmra.mxu0 %v648
    %v687 = vpop.f32.mrf.mxu0
    %v688 = vadd.f32 0.0, %v687
    %v689 = vpop.f32.mrf.mxu0
    %v690 = vpop.f32.mrf.mxu0
    %v691 = vpop.f32.mrf.mxu0
    %692 = vdwg.mxu0
    %v693 = vrcp.pop %v643
    %v694 = vmul.f32 %v688, %v693
    %695 = vst.msk [vmem:[#allocation2 + $0x8] sm:$0xff] %vm128, %v694
    %696 = vrot.lane.b32.xlu0 %v585, 120
    %v697 = vpop.permute.xlu0 %696
    %698 = vrot.lane.b32.xlu0 %v585, 88
    %v699 = vpop.permute.xlu0 %698
    %v701 = vsel %vm128, %v697, 0
    %v704 = vsel %vm128, %v699, 0
    %706 = vmatprep.subr.bf16.mxu0 0
    %707 = vmatpush1.bf16.xpose.msra.mxu0 0
    %708 = vmatprep.subr.bf16.mxu0 0
    %709 = vmatpush1.bf16.xpose.msra.mxu0 0
    %710 = vmatprep.subr.bf16.mxu0 0
    %711 = vmatpush1.bf16.xpose.msra.mxu0 0
    %712 = vmatprep.subr.bf16.mxu0 0
    %713 = vmatpush1.bf16.xpose.msra.mxu0 0
    %714 = vmatprep.subr.bf16.mxu0 0
    %715 = vmatpush1.bf16.xpose.msra.mxu0 0
    %716 = vmatprep.subr.bf16.mxu0 0
    %717 = vmatpush1.bf16.xpose.msra.mxu0 0
    %718 = vmatprep.subr.bf16.mxu0 0
    %719 = vmatpush1.bf16.xpose.msra.mxu0 0
    %720 = vmatprep.subr.bf16.mxu0 0
    %721 = vmatpush1.bf16.xpose.msra.mxu0 %v704
    %722 = vmatprep.subr.bf16.mxu0 0
    %723 = vmatpush2.bf16.xpose.msra.mxu0 0
    %724 = vmatprep.subr.bf16.mxu0 0
    %725 = vmatpush2.bf16.xpose.msra.mxu0 0
    %726 = vmatprep.subr.bf16.mxu0 0
    %727 = vmatpush2.bf16.xpose.msra.mxu0 0
    %728 = vmatprep.subr.bf16.mxu0 0
    %729 = vmatpush2.bf16.xpose.msra.mxu0 0
    %730 = vmatprep.subr.bf16.mxu0 0
    %731 = vmatpush2.bf16.xpose.msra.mxu0 0
    %732 = vmatprep.subr.bf16.mxu0 0
    %733 = vmatpush2.bf16.xpose.msra.mxu0 0
    %734 = vmatprep.subr.bf16.mxu0 0
    %735 = vmatpush2.bf16.xpose.msra.mxu0 0
    %736 = vmatprep.subr.bf16.mxu0 0
    %737 = vmatpush2.bf16.xpose.msra.mxu0 0
    %738 = vmatprep.mubr.bf16.mxu0 0
    %739 = vmatmul.mubr.bf16.gmra.mxu0 %v701
    %v740 = vpop.f32.mrf.mxu0
    %v741 = vadd.f32 0.0, %v740
    %v742 = vpop.f32.mrf.mxu0
    %v743 = vpop.f32.mrf.mxu0
    %v744 = vpop.f32.mrf.mxu0
    %745 = vdwg.mxu0
    %v746 = vsel %vm128, %v741, -inf
    %747 = vmax.xlane.f32.xlu0 %v746
    %v748 = vpop.xlane.xlu0 %747
    %v749 = vsub.f32 %v741, %v748
    %v750 = vmul.f32 %v749, 1.442695
    %v751 = vpow.pop %v750
    %v752 = vsel %vm128, %v751, 0.0
    %753 = vadd.xlane.f32.xlu0 %v752
    %v754 = vpop.xlane.xlu0 %753
    %v755 = vpack.c.bf16 %v751, %v751
    %756 = vrot.lane.b32.xlu0 %v585, 56
    %v757 = vpop.permute.xlu0 %756
    %v759 = vsel %vm128, %v755, 0
    %v762 = vsel %vm190, %v757, 0
    %764 = vmatprep.subr.bf16.mxu0 0
    %765 = vmatpush1.bf16.msra.mxu0 0
    %766 = vmatprep.subr.bf16.mxu0 0
    %767 = vmatpush1.bf16.msra.mxu0 0
    %768 = vmatprep.subr.bf16.mxu0 0
    %769 = vmatpush1.bf16.msra.mxu0 0
    %770 = vmatprep.subr.bf16.mxu0 0
    %771 = vmatpush1.bf16.msra.mxu0 0
    %772 = vmatprep.subr.bf16.mxu0 0
    %773 = vmatpush1.bf16.msra.mxu0 0
    %774 = vmatprep.subr.bf16.mxu0 0
    %775 = vmatpush1.bf16.msra.mxu0 0
    %776 = vmatprep.subr.bf16.mxu0 0
    %777 = vmatpush1.bf16.msra.mxu0 0
    %778 = vmatprep.subr.bf16.mxu0 0
    %779 = vmatpush1.bf16.msra.mxu0 %v762
    %780 = vmatprep.subr.bf16.mxu0 0
    %781 = vmatpush2.bf16.msra.mxu0 0
    %782 = vmatprep.subr.bf16.mxu0 0
    %783 = vmatpush2.bf16.msra.mxu0 0
    %784 = vmatprep.subr.bf16.mxu0 0
    %785 = vmatpush2.bf16.msra.mxu0 0
    %786 = vmatprep.subr.bf16.mxu0 0
    %787 = vmatpush2.bf16.msra.mxu0 0
    %788 = vmatprep.subr.bf16.mxu0 0
    %789 = vmatpush2.bf16.msra.mxu0 0
    %790 = vmatprep.subr.bf16.mxu0 0
    %791 = vmatpush2.bf16.msra.mxu0 0
    %792 = vmatprep.subr.bf16.mxu0 0
    %793 = vmatpush2.bf16.msra.mxu0 0
    %794 = vmatprep.subr.bf16.mxu0 0
    %795 = vmatpush2.bf16.msra.mxu0 0
    %796 = vmatprep.mubr.bf16.mxu0 0
    %797 = vmatmul.mubr.bf16.gmra.mxu0 %v759
    %v798 = vpop.f32.mrf.mxu0
    %v799 = vadd.f32 0.0, %v798
    %v800 = vpop.f32.mrf.mxu0
    %v801 = vpop.f32.mrf.mxu0
    %v802 = vpop.f32.mrf.mxu0
    %803 = vdwg.mxu0
    %v804 = vrcp.pop %v754
    %v805 = vmul.f32 %v799, %v804
    %807 = vrot.lane.b32.xlu0 %v805, 8
    %v808 = vpop.permute.xlu0 %807
    %810 = vst.msk [vmem:[#allocation2 + $0x8] sm:$0xff] %vm351, %v808
    %811 = vrot.lane.b32.xlu0 %v585, 112
    %v812 = vpop.permute.xlu0 %811
    %813 = vrot.lane.b32.xlu0 %v585, 80
    %v814 = vpop.permute.xlu0 %813
    %v816 = vsel %vm128, %v812, 0
    %v819 = vsel %vm128, %v814, 0
    %821 = vmatprep.subr.bf16.mxu0 0
    %822 = vmatpush1.bf16.xpose.msra.mxu0 0
    %823 = vmatprep.subr.bf16.mxu0 0
    %824 = vmatpush1.bf16.xpose.msra.mxu0 0
    %825 = vmatprep.subr.bf16.mxu0 0
    %826 = vmatpush1.bf16.xpose.msra.mxu0 0
    %827 = vmatprep.subr.bf16.mxu0 0
    %828 = vmatpush1.bf16.xpose.msra.mxu0 0
    %829 = vmatprep.subr.bf16.mxu0 0
    %830 = vmatpush1.bf16.xpose.msra.mxu0 0
    %831 = vmatprep.subr.bf16.mxu0 0
    %832 = vmatpush1.bf16.xpose.msra.mxu0 0
    %833 = vmatprep.subr.bf16.mxu0 0
    %834 = vmatpush1.bf16.xpose.msra.mxu0 0
    %835 = vmatprep.subr.bf16.mxu0 0
    %836 = vmatpush1.bf16.xpose.msra.mxu0 %v819
    %837 = vmatprep.subr.bf16.mxu0 0
    %838 = vmatpush2.bf16.xpose.msra.mxu0 0
    %839 = vmatprep.subr.bf16.mxu0 0
    %840 = vmatpush2.bf16.xpose.msra.mxu0 0
    %841 = vmatprep.subr.bf16.mxu0 0
    %842 = vmatpush2.bf16.xpose.msra.mxu0 0
    %843 = vmatprep.subr.bf16.mxu0 0
    %844 = vmatpush2.bf16.xpose.msra.mxu0 0
    %845 = vmatprep.subr.bf16.mxu0 0
    %846 = vmatpush2.bf16.xpose.msra.mxu0 0
    %847 = vmatprep.subr.bf16.mxu0 0
    %848 = vmatpush2.bf16.xpose.msra.mxu0 0
    %849 = vmatprep.subr.bf16.mxu0 0
    %850 = vmatpush2.bf16.xpose.msra.mxu0 0
    %851 = vmatprep.subr.bf16.mxu0 0
    %852 = vmatpush2.bf16.xpose.msra.mxu0 0
    %853 = vmatprep.mubr.bf16.mxu0 0
    %854 = vmatmul.mubr.bf16.gmra.mxu0 %v816
    %v855 = vpop.f32.mrf.mxu0
    %v856 = vadd.f32 0.0, %v855
    %v857 = vpop.f32.mrf.mxu0
    %v858 = vpop.f32.mrf.mxu0
    %v859 = vpop.f32.mrf.mxu0
    %860 = vdwg.mxu0
    %v861 = vsel %vm128, %v856, -inf
    %862 = vmax.xlane.f32.xlu0 %v861
    %v863 = vpop.xlane.xlu0 %862
    %v864 = vsub.f32 %v856, %v863
    %v865 = vmul.f32 %v864, 1.442695
    %v866 = vpow.pop %v865
    %v867 = vsel %vm128, %v866, 0.0
    %868 = vadd.xlane.f32.xlu0 %v867
    %v869 = vpop.xlane.xlu0 %868
    %v870 = vpack.c.bf16 %v866, %v866
    %871 = vrot.lane.b32.xlu0 %v585, 48
    %v872 = vpop.permute.xlu0 %871
    %v874 = vsel %vm128, %v870, 0
    %v877 = vsel %vm190, %v872, 0
    %879 = vmatprep.subr.bf16.mxu0 0
    %880 = vmatpush1.bf16.msra.mxu0 0
    %881 = vmatprep.subr.bf16.mxu0 0
    %882 = vmatpush1.bf16.msra.mxu0 0
    %883 = vmatprep.subr.bf16.mxu0 0
    %884 = vmatpush1.bf16.msra.mxu0 0
    %885 = vmatprep.subr.bf16.mxu0 0
    %886 = vmatpush1.bf16.msra.mxu0 0
    %887 = vmatprep.subr.bf16.mxu0 0
    %888 = vmatpush1.bf16.msra.mxu0 0
    %889 = vmatprep.subr.bf16.mxu0 0
    %890 = vmatpush1.bf16.msra.mxu0 0
    %891 = vmatprep.subr.bf16.mxu0 0
    %892 = vmatpush1.bf16.msra.mxu0 0
    %893 = vmatprep.subr.bf16.mxu0 0
    %894 = vmatpush1.bf16.msra.mxu0 %v877
    %895 = vmatprep.subr.bf16.mxu0 0
    %896 = vmatpush2.bf16.msra.mxu0 0
    %897 = vmatprep.subr.bf16.mxu0 0
    %898 = vmatpush2.bf16.msra.mxu0 0
    %899 = vmatprep.subr.bf16.mxu0 0
    %900 = vmatpush2.bf16.msra.mxu0 0
    %901 = vmatprep.subr.bf16.mxu0 0
    %902 = vmatpush2.bf16.msra.mxu0 0
    %903 = vmatprep.subr.bf16.mxu0 0
    %904 = vmatpush2.bf16.msra.mxu0 0
    %905 = vmatprep.subr.bf16.mxu0 0
    %906 = vmatpush2.bf16.msra.mxu0 0
    %907 = vmatprep.subr.bf16.mxu0 0
    %908 = vmatpush2.bf16.msra.mxu0 0
    %909 = vmatprep.subr.bf16.mxu0 0
    %910 = vmatpush2.bf16.msra.mxu0 0
    %911 = vmatprep.mubr.bf16.mxu0 0
    %912 = vmatmul.mubr.bf16.gmra.mxu0 %v874
    %v913 = vpop.f32.mrf.mxu0
    %v914 = vadd.f32 0.0, %v913
    %v915 = vpop.f32.mrf.mxu0
    %v916 = vpop.f32.mrf.mxu0
    %v917 = vpop.f32.mrf.mxu0
    %918 = vdwg.mxu0
    %v919 = vrcp.pop %v869
    %v920 = vmul.f32 %v914, %v919
    %922 = vrot.lane.b32.xlu0 %v920, 16
    %v923 = vpop.permute.xlu0 %922
    %925 = vst.msk [vmem:[#allocation2 + $0x8] sm:$0xff] %vm467, %v923
    %926 = vrot.lane.b32.xlu0 %v585, 104
    %v927 = vpop.permute.xlu0 %926
    %928 = vrot.lane.b32.xlu0 %v585, 72
    %v929 = vpop.permute.xlu0 %928
    %v931 = vsel %vm128, %v927, 0
    %v934 = vsel %vm128, %v929, 0
    %936 = vmatprep.subr.bf16.mxu0 0
    %937 = vmatpush1.bf16.xpose.msra.mxu0 0
    %938 = vmatprep.subr.bf16.mxu0 0
    %939 = vmatpush1.bf16.xpose.msra.mxu0 0
    %940 = vmatprep.subr.bf16.mxu0 0
    %941 = vmatpush1.bf16.xpose.msra.mxu0 0
    %942 = vmatprep.subr.bf16.mxu0 0
    %943 = vmatpush1.bf16.xpose.msra.mxu0 0
    %944 = vmatprep.subr.bf16.mxu0 0
    %945 = vmatpush1.bf16.xpose.msra.mxu0 0
    %946 = vmatprep.subr.bf16.mxu0 0
    %947 = vmatpush1.bf16.xpose.msra.mxu0 0
    %948 = vmatprep.subr.bf16.mxu0 0
    %949 = vmatpush1.bf16.xpose.msra.mxu0 0
    %950 = vmatprep.subr.bf16.mxu0 0
    %951 = vmatpush1.bf16.xpose.msra.mxu0 %v934
    %952 = vmatprep.subr.bf16.mxu0 0
    %953 = vmatpush2.bf16.xpose.msra.mxu0 0
    %954 = vmatprep.subr.bf16.mxu0 0
    %955 = vmatpush2.bf16.xpose.msra.mxu0 0
    %956 = vmatprep.subr.bf16.mxu0 0
    %957 = vmatpush2.bf16.xpose.msra.mxu0 0
    %958 = vmatprep.subr.bf16.mxu0 0
    %959 = vmatpush2.bf16.xpose.msra.mxu0 0
    %960 = vmatprep.subr.bf16.mxu0 0
    %961 = vmatpush2.bf16.xpose.msra.mxu0 0
    %962 = vmatprep.subr.bf16.mxu0 0
    %963 = vmatpush2.bf16.xpose.msra.mxu0 0
    %964 = vmatprep.subr.bf16.mxu0 0
    %965 = vmatpush2.bf16.xpose.msra.mxu0 0
    %966 = vmatprep.subr.bf16.mxu0 0
    %967 = vmatpush2.bf16.xpose.msra.mxu0 0
    %968 = vmatprep.mubr.bf16.mxu0 0
    %969 = vmatmul.mubr.bf16.gmra.mxu0 %v931
    %v970 = vpop.f32.mrf.mxu0
    %v971 = vadd.f32 0.0, %v970
    %v972 = vpop.f32.mrf.mxu0
    %v973 = vpop.f32.mrf.mxu0
    %v974 = vpop.f32.mrf.mxu0
    %975 = vdwg.mxu0
    %v976 = vsel %vm128, %v971, -inf
    %977 = vmax.xlane.f32.xlu0 %v976
    %v978 = vpop.xlane.xlu0 %977
    %v979 = vsub.f32 %v971, %v978
    %v980 = vmul.f32 %v979, 1.442695
    %v981 = vpow.pop %v980
    %v982 = vsel %vm128, %v981, 0.0
    %983 = vadd.xlane.f32.xlu0 %v982
    %v984 = vpop.xlane.xlu0 %983
    %v985 = vpack.c.bf16 %v981, %v981
    %986 = vrot.lane.b32.xlu0 %v585, 40
    %v987 = vpop.permute.xlu0 %986
    %v989 = vsel %vm128, %v985, 0
    %v992 = vsel %vm190, %v987, 0
    %994 = vmatprep.subr.bf16.mxu0 0
    %995 = vmatpush1.bf16.msra.mxu0 0
    %996 = vmatprep.subr.bf16.mxu0 0
    %997 = vmatpush1.bf16.msra.mxu0 0
    %998 = vmatprep.subr.bf16.mxu0 0
    %999 = vmatpush1.bf16.msra.mxu0 0
    %1000 = vmatprep.subr.bf16.mxu0 0
    %1001 = vmatpush1.bf16.msra.mxu0 0
    %1002 = vmatprep.subr.bf16.mxu0 0
    %1003 = vmatpush1.bf16.msra.mxu0 0
    %1004 = vmatprep.subr.bf16.mxu0 0
    %1005 = vmatpush1.bf16.msra.mxu0 0
    %1006 = vmatprep.subr.bf16.mxu0 0
    %1007 = vmatpush1.bf16.msra.mxu0 0
    %1008 = vmatprep.subr.bf16.mxu0 0
    %1009 = vmatpush1.bf16.msra.mxu0 %v992
    %1010 = vmatprep.subr.bf16.mxu0 0
    %1011 = vmatpush2.bf16.msra.mxu0 0
    %1012 = vmatprep.subr.bf16.mxu0 0
    %1013 = vmatpush2.bf16.msra.mxu0 0
    %1014 = vmatprep.subr.bf16.mxu0 0
    %1015 = vmatpush2.bf16.msra.mxu0 0
    %1016 = vmatprep.subr.bf16.mxu0 0
    %1017 = vmatpush2.bf16.msra.mxu0 0
    %1018 = vmatprep.subr.bf16.mxu0 0
    %1019 = vmatpush2.bf16.msra.mxu0 0
    %1020 = vmatprep.subr.bf16.mxu0 0
    %1021 = vmatpush2.bf16.msra.mxu0 0
    %1022 = vmatprep.subr.bf16.mxu0 0
    %1023 = vmatpush2.bf16.msra.mxu0 0
    %1024 = vmatprep.subr.bf16.mxu0 0
    %1025 = vmatpush2.bf16.msra.mxu0 0
    %1026 = vmatprep.mubr.bf16.mxu0 0
    %1027 = vmatmul.mubr.bf16.gmra.mxu0 %v989
    %v1028 = vpop.f32.mrf.mxu0
    %v1029 = vadd.f32 0.0, %v1028
    %v1030 = vpop.f32.mrf.mxu0
    %v1031 = vpop.f32.mrf.mxu0
    %v1032 = vpop.f32.mrf.mxu0
    %1033 = vdwg.mxu0
    %v1034 = vrcp.pop %v984
    %v1035 = vmul.f32 %v1029, %v1034
    %1037 = vrot.lane.b32.xlu0 %v1035, 24
    %v1038 = vpop.permute.xlu0 %1037
    %1040 = vst.msk [vmem:[#allocation2 + $0x8] sm:$0xff] %vm583, %v1038
    %v1041 = vld [vmem:[#allocation2] sm:$0xff]
    %v1042 = vld [vmem:[#allocation2 + $0x8] sm:$0xff]
    %v1043 = vpack.c.bf16 %v1042, %v1041
    %v1044 = vld [vmem:[#allocation8] sm:$0xf]
    %v1045 = vld [vmem:[#allocation8 + $0x4] sm:$0xf]
    %v1046 = vld [vmem:[#allocation8 + $0x8] sm:$0xf]
    %v1047 = vld [vmem:[#allocation8 + $0xc] sm:$0xf]
    %v1048 = vld [vmem:[%s3] sm:$0x1]
    %v1050 = vlaneseq
    %v1051 = vshrl.u32 %v1050, 7
    %v1052 = vsub.s32 0, %v1051
    %v1053 = vrot.slane %v1048, %v1052
    %v1059 = vunpack.c.l.b16 %v1044
    %v1060 = vunpack.c.l.b16 %v1045
    %v1061 = vunpack.c.l.b16 %v1046
    %v1062 = vunpack.c.l.b16 %v1047
    %v1063 = vpack.c.b16 %v1060, %v1059
    %v1064 = vpack.c.b16 %v1062, %v1061
    %v1068 = vsel %vm79, %v1043, 0
    %1070 = vmatprep.subr.bf16.mxu0 0
    %1071 = vmatpush1.bf16.msra.mxu0 0
    %1072 = vmatprep.subr.bf16.mxu0 0
    %1073 = vmatpush1.bf16.msra.mxu0 0
    %1074 = vmatprep.subr.bf16.mxu0 0
    %1075 = vmatpush1.bf16.msra.mxu0 0
    %1076 = vmatprep.subr.bf16.mxu0 0
    %1077 = vmatpush1.bf16.msra.mxu0 0
    %1078 = vmatprep.subr.bf16.mxu0 0
    %1079 = vmatpush1.bf16.msra.mxu0 0
    %1080 = vmatprep.subr.bf16.mxu0 0
    %1081 = vmatpush1.bf16.msra.mxu0 0
    %1082 = vmatprep.subr.bf16.mxu0 0
    %1083 = vmatpush1.bf16.msra.mxu0 %v1064
    %1084 = vmatprep.subr.bf16.mxu0 0
    %1085 = vmatpush1.bf16.msra.mxu0 %v1063
    %1086 = vmatprep.subr.bf16.mxu0 0
    %1087 = vmatpush2.bf16.msra.mxu0 0
    %1088 = vmatprep.subr.bf16.mxu0 0
    %1089 = vmatpush2.bf16.msra.mxu0 0
    %1090 = vmatprep.subr.bf16.mxu0 0
    %1091 = vmatpush2.bf16.msra.mxu0 0
    %1092 = vmatprep.subr.bf16.mxu0 0
    %1093 = vmatpush2.bf16.msra.mxu0 0
    %1094 = vmatprep.subr.bf16.mxu0 0
    %1095 = vmatpush2.bf16.msra.mxu0 0
    %1096 = vmatprep.subr.bf16.mxu0 0
    %1097 = vmatpush2.bf16.msra.mxu0 0
    %1098 = vmatprep.subr.bf16.mxu0 0
    %1099 = vmatpush2.bf16.msra.mxu0 0
    %1100 = vmatprep.subr.bf16.mxu0 0
    %1101 = vmatpush2.bf16.msra.mxu0 0
    %1102 = vmatprep.mubr.bf16.mxu0 0
    %1103 = vmatmul.mubr.bf16.gmra.mxu0 %v1068
    %v1104 = vpop.f32.mrf.mxu0
    %v1105 = vadd.f32 %v1053, %v1104
    %v1106 = vpop.f32.mrf.mxu0
    %v1107 = vpop.f32.mrf.mxu0
    %v1108 = vadd.f32 %v1053, %v1107
    %v1109 = vpop.f32.mrf.mxu0
    %1110 = vdwg.mxu0
    %1111 = vst.msk [vmem:[#allocation9] sm:$0xff] %vm79, %v1105
    %1112 = vst.msk [vmem:[#allocation9 + $0x8] sm:$0xff] %vm79, %v1108
    // Predicated region
    $region30: #{tpu_custom_call.1} parent=1 // pred_check
      _
    $region31: #{tpu_custom_call.1} parent=1 // pred_check_branch
      %1114 = sbr.rel (0) target = $region33
    $region32: #{tpu_custom_call.1} parent=1 // pred_region
      %s1116 = ssub.s32 256, 256
      %1117 = vsyncadd [#allocation5], %s1116
      %s1118 = sshll.u32 [#allocation9], 4
      %s1119 = int_to_ptr.vmem [resolvable:$true] %s1118
      %1124 = dma.vmem_to_hbm [thread:$0]  %s1119, 256, %s4, [#allocation5], 128, 128, 8
    $region33: #{tpu_custom_call.1} parent=1 // pred_fallthru
      _
    // Predicated region
    $region34: #{tpu_custom_call.1} parent=1 // pred_check
      _
    $region35: #{tpu_custom_call.1} parent=1 // pred_check_branch
      %1126 = sbr.rel (0) target = $region37
    $region36: #{tpu_custom_call.1} parent=1 // pred_region
      %1127 = dma.done [#allocation5], 256
    $region37: #{tpu_custom_call.1} parent=1 // pred_fallthru
      _
    %1128 = vsyncpa [#allocation4], 1
    %1129 = vsyncpa [#allocation7], 1
    %1130 = vsyncpa [#allocation5], 1

</llo_original>
